<compile_context>
chip_gen: v7x
topology: tpu7x:2x2x1
jax: 0.10.0
libtpu: 0.0.40
codegen_flags: <defaults>
</compile_context>

<pallas_src>
import jax
import jax.numpy as jnp
from jax.experimental import pallas as pl
from jax.experimental.pallas import tpu as pltpu

HIGH = jax.lax.Precision.HIGHEST


def foldingnet_kernel(gh1_ref, cwh1_ref, cwh4_ref,
                      w2_ref, b2_ref,
                      w3_ref, b3_ref,
                      w4p_ref,
                      w5_ref, b5_ref,
                      w6t_ref, b6t_ref,
                      out_ref):
    # ---- fold1, layer 1: relu(grid@W1g + b1 + cw@W1c)  (matmuls hoisted, bf16) ----
    h = jnp.maximum(gh1_ref[...] + cwh1_ref[0], 0.0)                    # (TM, Hp) bf16

    # ---- fold1, layer 2 (bf16 MXU, f32 accumulate) ----
    h = jnp.dot(h, w2_ref[...], preferred_element_type=jnp.float32) + b2_ref[...]
    h = jnp.maximum(h, 0.0)

    # ---- fold1, layer 3 (bf16 MXU, f32 accumulate, no ReLU) ----
    out1 = jnp.dot(h.astype(jnp.bfloat16), w3_ref[...],
                   preferred_element_type=jnp.float32) + b3_ref[...]    # (TM, 3)

    # ---- fold2, layer 1: relu(out1@W4p + (cw@W4c + b4))  (cw term hoisted) ----
    h = jnp.dot(out1.astype(jnp.bfloat16), w4p_ref[...],
                preferred_element_type=jnp.float32) + cwh4_ref[0]
    h = jnp.maximum(h, 0.0)

    # ---- fold2, layer 2 (bf16 MXU, f32 accumulate) ----
    h = jnp.dot(h.astype(jnp.bfloat16), w5_ref[...],
                preferred_element_type=jnp.float32) + b5_ref[...]
    h = jnp.maximum(h, 0.0)

    # ---- fold2, layer 3, computed transposed: (3,Hp).(TM,Hp)^T -> (3, TM) ----
    # Lane-dense store (last dim = TM, 128-aligned), no masked vst.msk writeback.
    out2_t = jax.lax.dot_general(
        w6t_ref[...], h.astype(jnp.bfloat16),
        dimension_numbers=(((1,), (1,)), ((), ())),
        preferred_element_type=jnp.float32) + b6t_ref[...]              # (3, TM)

    out_ref[0] = out2_t.astype(out_ref.dtype)


def _choose_tiling(M):
    """Pad M to a 128 multiple; pick the largest dividing M-tile (capped at 1024
    for v7x's smaller VMEM), preferring >=2 tiles so megacore can split the
    point axis even at batch size 1."""
    m_pad = max(128, -(-M // 128) * 128)
    tm = 128
    for cand in (1024, 512, 256, 128):
        if m_pad % cand == 0:
            tm = cand
            break
    if m_pad // tm < 2 and (m_pad // 2) >= 128 and (m_pad // 2) % 128 == 0:
        tm = m_pad // 2
    return m_pad, tm


def foldingnet_forward(cw, plane_grid, params, *, tm=None):
    """cw: (B, C), plane_grid: (M, 2), params: dict of weights. Returns (B, M, 3) f32."""
    B, C = cw.shape
    M = plane_grid.shape[0]
    H = params["w2"].shape[0]
    bf16 = jnp.bfloat16

    # ---- hoisted degenerate layer-1 matmuls (once per forward, plain XLA) ----
    grid_h1 = jnp.dot(plane_grid, params["w1g"], precision=HIGH) + params["b1"]   # (M, H)
    cwh1 = jnp.dot(cw, params["w1c"], precision=HIGH)                             # (B, H)
    cwh4 = jnp.dot(cw, params["w4c"], precision=HIGH) + params["b4"]              # (B, H)

    # ---- pad the hidden dim to a full 128-lane group (zero pad is exact) ----
    Hp = max(128, -(-H // 128) * 128)
    ph = Hp - H

    def pad_h(x, axes):
        if ph == 0:
            return x
        pad = [(0, 0)] * x.ndim
        for a in axes:
            pad[a] = (0, ph)
        return jnp.pad(x, pad)

    grid_h1 = pad_h(grid_h1, (1,)).astype(bf16)                 # (M, Hp) bf16 stream
    cwh1 = pad_h(cwh1, (1,)).astype(bf16)[:, None, :]           # (B, 1, Hp)
    cwh4 = pad_h(cwh4, (1,)).astype(bf16)[:, None, :]           # (B, 1, Hp)
    w2 = pad_h(params["w2"], (0, 1)).astype(bf16)               # (Hp, Hp)
    b2 = pad_h(params["b2"], (1,))                              # (1, Hp) f32
    w3 = pad_h(params["w3"], (0,)).astype(bf16)                 # (Hp, 3)
    b3 = params["b3"]                                           # (1, 3)  f32
    w4p = pad_h(params["w4p"], (1,)).astype(bf16)               # (3, Hp)
    w5 = pad_h(params["w5"], (0, 1)).astype(bf16)               # (Hp, Hp)
    b5 = pad_h(params["b5"], (1,))                              # (1, Hp) f32
    w6t = pad_h(params["w6"].T, (1,)).astype(bf16)              # (3, Hp)
    b6t = params["b6"].reshape(3, 1)                            # (3, 1)  f32

    # ---- pad M to a 128 multiple (lane-dense output, megacore-splittable) ----
    m_pad, tm_auto = _choose_tiling(M)
    if tm is None:
        tm = tm_auto
    assert m_pad % tm == 0
    num_m = m_pad // tm
    if m_pad != M:
        grid_h1 = jnp.pad(grid_h1, ((0, m_pad - M), (0, 0)))

    const2 = lambda shape: pl.BlockSpec(shape, lambda m, b: (0, 0))

    # Grid = (num_m, B): batch is the innermost loop, so the (tm, Hp) grid_h1
    # block (index depends only on m) stays VMEM-resident across the batch sweep.
    in_specs = [
        pl.BlockSpec((tm, Hp), lambda m, b: (m, 0)),        # grid_h1 tile (bf16)
        pl.BlockSpec((1, 1, Hp), lambda m, b: (b, 0, 0)),   # cwh1 (per batch)
        pl.BlockSpec((1, 1, Hp), lambda m, b: (b, 0, 0)),   # cwh4 + b4 (per batch)
        const2((Hp, Hp)), const2((1, Hp)),                  # fold1 layer 2
        const2((Hp, 3)), const2((1, 3)),                    # fold1 layer 3
        const2((3, Hp)),                                    # fold2 layer 1 (point side)
        const2((Hp, Hp)), const2((1, Hp)),                  # fold2 layer 2
        const2((3, Hp)), const2((3, 1)),                    # fold2 layer 3 (transposed)
    ]
    out_spec = pl.BlockSpec((1, 3, tm), lambda m, b: (b, 0, m))

    out_t = pl.pallas_call(
        foldingnet_kernel,
        out_shape=jax.ShapeDtypeStruct((B, 3, m_pad), jnp.float32),
        grid=(num_m, B),
        in_specs=in_specs,
        out_specs=out_spec,
        compiler_params=pltpu.CompilerParams(
            dimension_semantics=("parallel", "parallel"),
            vmem_limit_bytes=32 * 1024 * 1024),
    )(grid_h1, cwh1, cwh4,
      w2, b2, w3, b3, w4p, w5, b5, w6t, b6t)

    out_t = out_t[:, :, :M]                 # drop M padding
    return jnp.swapaxes(out_t, 1, 2)        # (B, M, 3)


# ----------------------------- references ---------------------------------- #

def reference_f32(cw, plane_grid, params):
    """Pure-f32 reference mirroring the PyTorch module exactly."""
    B, C = cw.shape
    M = plane_grid.shape[0]
    cw_exp = jnp.broadcast_to(cw[:, None, :], (B, M, C))
    grid_b = jnp.broadcast_to(plane_grid[None], (B, M, 2))

    in1 = jnp.concatenate([grid_b, cw_exp], axis=2)
    W1 = jnp.concatenate([params["w1g"], params["w1c"]], axis=0)
    h = jax.nn.relu(jnp.dot(in1, W1, precision=HIGH) + params["b1"])
    h = jax.nn.relu(jnp.dot(h, params["w2"], precision=HIGH) + params["b2"])
    out1 = jnp.dot(h, params["w3"], precision=HIGH) + params["b3"]

    in2 = jnp.concatenate([out1, cw_exp], axis=2)
    W4 = jnp.concatenate([params["w4p"], params["w4c"]], axis=0)
    h = jax.nn.relu(jnp.dot(in2, W4, precision=HIGH) + params["b4"])
    h = jax.nn.relu(jnp.dot(h, params["w5"], precision=HIGH) + params["b5"])
    out2 = jnp.dot(h, params["w6"], precision=HIGH) + params["b6"]
    return out2


def reference_mixed(cw, plane_grid, params):
    """Pure-JAX reference mirroring the kernel's mixed precision exactly
    (hoisted f32 layer-1 matmuls, bf16 inputs / f32 accumulation everywhere else)."""
    bf16 = jnp.bfloat16
    gh1 = (jnp.dot(plane_grid, params["w1g"], precision=HIGH) + params["b1"]).astype(bf16)
    cwh1 = jnp.dot(cw, params["w1c"], precision=HIGH).astype(bf16)
    cwh4 = (jnp.dot(cw, params["w4c"], precision=HIGH) + params["b4"]).astype(bf16)

    h = jnp.maximum(gh1[None] + cwh1[:, None], 0.0)                          # bf16
    h = jnp.maximum(jnp.dot(h, params["w2"].astype(bf16),
                            preferred_element_type=jnp.float32) + params["b2"], 0.0)
    out1 = jnp.dot(h.astype(bf16), params["w3"].astype(bf16),
                   preferred_element_type=jnp.float32) + params["b3"]
    h = jnp.maximum(jnp.dot(out1.astype(bf16), params["w4p"].astype(bf16),
                            preferred_element_type=jnp.float32) + cwh4[:, None], 0.0)
    h = jnp.maximum(jnp.dot(h.astype(bf16), params["w5"].astype(bf16),
                            preferred_element_type=jnp.float32) + params["b5"], 0.0)
    out2 = jnp.dot(h.astype(bf16), params["w6"].astype(bf16),
                   preferred_element_type=jnp.float32) + params["b6"]
    return out2


# ------------------------------ test setup --------------------------------- #

def make_params(key, C, H):
    """Deterministic synthetic params. folding1_dims=[2+C,H,H,3], folding2_dims=[3+C,H,H,3]."""
    ks = jax.random.split(key, 12)
    scale = 0.1
    return {
        "w1g": scale * jax.random.normal(ks[0], (2, H), jnp.float32),
        "w1c": scale * jax.random.normal(ks[1], (C, H), jnp.float32),
        "b1":  scale * jax.random.normal(ks[2], (1, H), jnp.float32),
        "w2":  scale * jax.random.normal(ks[3], (H, H), jnp.float32),
        "b2":  scale * jax.random.normal(ks[4], (1, H), jnp.float32),
        "w3":  scale * jax.random.normal(ks[5], (H, 3), jnp.float32),
        "b3":  scale * jax.random.normal(ks[6], (1, 3), jnp.float32),
        "w4p": scale * jax.random.normal(ks[7], (3, H), jnp.float32),
        "w4c": scale * jax.random.normal(ks[8], (C, H), jnp.float32),
        "b4":  scale * jax.random.normal(ks[9], (1, H), jnp.float32),
        "w5":  scale * jax.random.normal(ks[10], (H, H), jnp.float32),
        "b5":  jnp.zeros((1, H), jnp.float32),
        "w6":  scale * jax.random.normal(ks[11], (H, 3), jnp.float32),
        "b6":  jnp.zeros((1, 3), jnp.float32),
    }


def make_plane_grid(gx, gy):
    # matches torch.meshgrid(linspace, linspace) (ij indexing) -> stack -> reshape(-1, 2)
    rx = jnp.linspace(-1.0, 1.0, gx)
    ry = jnp.linspace(-1.0, 1.0, gy)
    xc, yc = jnp.meshgrid(rx, ry, indexing="ij")
    return jnp.stack([xc, yc], axis=-1).reshape(-1, 2).astype(jnp.float32)


if __name__ == "__main__":
    # small synthetic configuration: codeword dim 32, hidden 64, 4x4 plane grid
    B, C, H = 2, 32, 64
    GX, GY = 4, 4

    key = jax.random.PRNGKey(0)
    k_cw, k_p = jax.random.split(key)
    cw = jax.random.normal(k_cw, (B, C), jnp.float32)
    plane_grid = make_plane_grid(GX, GY)          # (16, 2)
    params = make_params(k_p, C, H)

    out = foldingnet_forward(cw, plane_grid, params)
    out = jax.block_until_ready(out)
    assert out.shape == (B, GX * GY, 3)

    # tight check vs a reference with the kernel's exact mixed precision
    ref_m = reference_mixed(cw, plane_grid, params)
    assert jnp.allclose(out, ref_m, atol=1e-3, rtol=1e-3), "mismatch vs mixed-precision reference"

    # looser check vs the original full-f32 PyTorch semantics (bf16 truncation tolerance)
    ref_f = reference_f32(cw, plane_grid, params)
    assert jnp.allclose(out, ref_f, atol=3e-2, rtol=3e-2), "mismatch vs full-f32 reference"

    print("KERNEL_OK")
</pallas_src>

<mosaic_0001>
module attributes {stable_mosaic.version = 11 : i64} {
  func.func @foldingnet_kernel(%arg0: i32, %arg1: i32, %arg2: memref<128x128xbf16, #tpu.memory_space<vmem>>, %arg3: memref<1x1x128xbf16, #tpu.memory_space<vmem>>, %arg4: memref<1x1x128xbf16, #tpu.memory_space<vmem>>, %arg5: memref<128x128xbf16, #tpu.memory_space<vmem>>, %arg6: memref<1x128xf32, #tpu.memory_space<vmem>>, %arg7: memref<128x3xbf16, #tpu.memory_space<vmem>>, %arg8: memref<1x3xf32, #tpu.memory_space<vmem>>, %arg9: memref<3x128xbf16, #tpu.memory_space<vmem>>, %arg10: memref<128x128xbf16, #tpu.memory_space<vmem>>, %arg11: memref<1x128xf32, #tpu.memory_space<vmem>>, %arg12: memref<3x128xbf16, #tpu.memory_space<vmem>>, %arg13: memref<3x1xf32, #tpu.memory_space<vmem>>, %arg14: memref<1x3x128xf32, #tpu.memory_space<vmem>>) attributes {dimension_semantics = [#tpu.dimension_semantics<parallel>, #tpu.dimension_semantics<parallel>], iteration_bounds = array<i64: 1, 2>, scalar_prefetch = 0 : i64, scratch_operands = 0 : i64, tpu.core_type = #tpu.core_type<tc>, window_params = [{transform_indices = @transform_0, window_bounds = array<i64: 128, 128>}, {transform_indices = @transform_1, window_bounds = array<i64: 1, 1, 128>}, {transform_indices = @transform_2, window_bounds = array<i64: 1, 1, 128>}, {pipeline_mode = #tpu.pipeline_mode<synchronous>, transform_indices = @transform_3, window_bounds = array<i64: 128, 128>}, {pipeline_mode = #tpu.pipeline_mode<synchronous>, transform_indices = @transform_4, window_bounds = array<i64: 1, 128>}, {pipeline_mode = #tpu.pipeline_mode<synchronous>, transform_indices = @transform_5, window_bounds = array<i64: 128, 3>}, {pipeline_mode = #tpu.pipeline_mode<synchronous>, transform_indices = @transform_6, window_bounds = array<i64: 1, 3>}, {pipeline_mode = #tpu.pipeline_mode<synchronous>, transform_indices = @transform_7, window_bounds = array<i64: 3, 128>}, {pipeline_mode = #tpu.pipeline_mode<synchronous>, transform_indices = @transform_8, window_bounds = array<i64: 128, 128>}, {pipeline_mode = #tpu.pipeline_mode<synchronous>, transform_indices = @transform_9, window_bounds = array<i64: 1, 128>}, {pipeline_mode = #tpu.pipeline_mode<synchronous>, transform_indices = @transform_10, window_bounds = array<i64: 3, 128>}, {pipeline_mode = #tpu.pipeline_mode<synchronous>, transform_indices = @transform_11, window_bounds = array<i64: 3, 1>}, {transform_indices = @transform_12, window_bounds = array<i64: 1, 3, 128>}]} {
    %c0 = arith.constant 0 : index
    %c0_0 = arith.constant 0 : index
    %0 = vector.load %arg2[%c0, %c0_0] : memref<128x128xbf16, #tpu.memory_space<vmem>>, vector<128x128xbf16>
    %c0_1 = arith.constant 0 : index
    %c0_2 = arith.constant 0 : index
    %c0_3 = arith.constant 0 : index
    %1 = vector.load %arg3[%c0_1, %c0_2, %c0_3] : memref<1x1x128xbf16, #tpu.memory_space<vmem>>, vector<1x1x128xbf16>
    %2 = vector.shape_cast %1 : vector<1x1x128xbf16> to vector<1x128xbf16>
    %3 = vector.broadcast %2 : vector<1x128xbf16> to vector<128x128xbf16>
    %4 = arith.addf %0, %3 : vector<128x128xbf16>
    %cst = arith.constant 0.000000e+00 : bf16
    %5 = vector.broadcast %cst : bf16 to vector<128x128xbf16>
    %6 = arith.maximumf %4, %5 : vector<128x128xbf16>
    %c0_4 = arith.constant 0 : index
    %c0_5 = arith.constant 0 : index
    %7 = vector.load %arg5[%c0_4, %c0_5] : memref<128x128xbf16, #tpu.memory_space<vmem>>, vector<128x128xbf16>
    %cst_6 = arith.constant dense<0.000000e+00> : vector<128x128xf32>
    %8 = tpu.matmul %6, %7, %cst_6 {dimension_numbers = #tpu.dot_dimension_numbers<[1], [0], [0], [1], [0, 0, 1, 1], [], []>} : vector<128x128xbf16>, vector<128x128xbf16>, vector<128x128xf32> -> vector<128x128xf32>
    %c0_7 = arith.constant 0 : index
    %c0_8 = arith.constant 0 : index
    %9 = vector.load %arg6[%c0_7, %c0_8] : memref<1x128xf32, #tpu.memory_space<vmem>>, vector<1x128xf32>
    %10 = vector.broadcast %9 : vector<1x128xf32> to vector<128x128xf32>
    %11 = arith.addf %8, %10 : vector<128x128xf32>
    %cst_9 = arith.constant 0.000000e+00 : f32
    %12 = vector.broadcast %cst_9 : f32 to vector<128x128xf32>
    %13 = arith.maximumf %11, %12 : vector<128x128xf32>
    %14 = arith.truncf %13 : vector<128x128xf32> to vector<128x128xbf16>
    %c0_10 = arith.constant 0 : index
    %c0_11 = arith.constant 0 : index
    %15 = vector.load %arg7[%c0_10, %c0_11] : memref<128x3xbf16, #tpu.memory_space<vmem>>, vector<128x3xbf16>
    %cst_12 = arith.constant dense<0.000000e+00> : vector<128x3xf32>
    %16 = tpu.matmul %14, %15, %cst_12 {dimension_numbers = #tpu.dot_dimension_numbers<[1], [0], [0], [1], [0, 0, 1, 1], [], []>} : vector<128x128xbf16>, vector<128x3xbf16>, vector<128x3xf32> -> vector<128x3xf32>
    %c0_13 = arith.constant 0 : index
    %c0_14 = arith.constant 0 : index
    %17 = vector.load %arg8[%c0_13, %c0_14] : memref<1x3xf32, #tpu.memory_space<vmem>>, vector<1x3xf32>
    %18 = vector.broadcast %17 : vector<1x3xf32> to vector<128x3xf32>
    %19 = arith.addf %16, %18 : vector<128x3xf32>
    %20 = arith.truncf %19 : vector<128x3xf32> to vector<128x3xbf16>
    %c0_15 = arith.constant 0 : index
    %c0_16 = arith.constant 0 : index
    %21 = vector.load %arg9[%c0_15, %c0_16] : memref<3x128xbf16, #tpu.memory_space<vmem>>, vector<3x128xbf16>
    %cst_17 = arith.constant dense<0.000000e+00> : vector<128x128xf32>
    %22 = tpu.matmul %20, %21, %cst_17 {dimension_numbers = #tpu.dot_dimension_numbers<[1], [0], [0], [1], [0, 0, 1, 1], [], []>} : vector<128x3xbf16>, vector<3x128xbf16>, vector<128x128xf32> -> vector<128x128xf32>
    %c0_18 = arith.constant 0 : index
    %c0_19 = arith.constant 0 : index
    %c0_20 = arith.constant 0 : index
    %23 = vector.load %arg4[%c0_18, %c0_19, %c0_20] : memref<1x1x128xbf16, #tpu.memory_space<vmem>>, vector<1x1x128xbf16>
    %24 = vector.shape_cast %23 : vector<1x1x128xbf16> to vector<1x128xbf16>
    %25 = arith.extf %24 : vector<1x128xbf16> to vector<1x128xf32>
    %26 = vector.broadcast %25 : vector<1x128xf32> to vector<128x128xf32>
    %27 = arith.addf %22, %26 : vector<128x128xf32>
    %cst_21 = arith.constant 0.000000e+00 : f32
    %28 = vector.broadcast %cst_21 : f32 to vector<128x128xf32>
    %29 = arith.maximumf %27, %28 : vector<128x128xf32>
    %30 = arith.truncf %29 : vector<128x128xf32> to vector<128x128xbf16>
    %c0_22 = arith.constant 0 : index
    %c0_23 = arith.constant 0 : index
    %31 = vector.load %arg10[%c0_22, %c0_23] : memref<128x128xbf16, #tpu.memory_space<vmem>>, vector<128x128xbf16>
    %cst_24 = arith.constant dense<0.000000e+00> : vector<128x128xf32>
    %32 = tpu.matmul %30, %31, %cst_24 {dimension_numbers = #tpu.dot_dimension_numbers<[1], [0], [0], [1], [0, 0, 1, 1], [], []>} : vector<128x128xbf16>, vector<128x128xbf16>, vector<128x128xf32> -> vector<128x128xf32>
    %c0_25 = arith.constant 0 : index
    %c0_26 = arith.constant 0 : index
    %33 = vector.load %arg11[%c0_25, %c0_26] : memref<1x128xf32, #tpu.memory_space<vmem>>, vector<1x128xf32>
    %34 = vector.broadcast %33 : vector<1x128xf32> to vector<128x128xf32>
    %35 = arith.addf %32, %34 : vector<128x128xf32>
    %cst_27 = arith.constant 0.000000e+00 : f32
    %36 = vector.broadcast %cst_27 : f32 to vector<128x128xf32>
    %37 = arith.maximumf %35, %36 : vector<128x128xf32>
    %c0_28 = arith.constant 0 : index
    %c0_29 = arith.constant 0 : index
    %38 = vector.load %arg12[%c0_28, %c0_29] : memref<3x128xbf16, #tpu.memory_space<vmem>>, vector<3x128xbf16>
    %39 = arith.truncf %37 : vector<128x128xf32> to vector<128x128xbf16>
    %cst_30 = arith.constant dense<0.000000e+00> : vector<3x128xf32>
    %40 = tpu.matmul %38, %39, %cst_30 {dimension_numbers = #tpu.dot_dimension_numbers<[1], [1], [0], [0], [0, 0, 1, 0], [], []>} : vector<3x128xbf16>, vector<128x128xbf16>, vector<3x128xf32> -> vector<3x128xf32>
    %c0_31 = arith.constant 0 : index
    %c0_32 = arith.constant 0 : index
    %41 = vector.load %arg13[%c0_31, %c0_32] : memref<3x1xf32, #tpu.memory_space<vmem>>, vector<3x1xf32>
    %42 = vector.broadcast %41 : vector<3x1xf32> to vector<3x128xf32>
    %43 = arith.addf %40, %42 : vector<3x128xf32>
    %c0_33 = arith.constant 0 : index
    %c0_34 = arith.constant 0 : index
    %c0_35 = arith.constant 0 : index
    %44 = vector.load %arg14[%c0_33, %c0_34, %c0_35] : memref<1x3x128xf32, #tpu.memory_space<vmem>>, vector<1x3x128xf32>
    %45 = vector.shape_cast %44 : vector<1x3x128xf32> to vector<3x128xf32>
    %46 = vector.shape_cast %43 : vector<3x128xf32> to vector<1x3x128xf32>
    tpu.vector_store %arg14[%c0_33, %c0_34, %c0_35], %46 {strides = array<i32>} : memref<1x3x128xf32, #tpu.memory_space<vmem>>, vector<1x3x128xf32>,
    return
  }
  func.func @transform_0(%arg0: i32, %arg1: i32) -> (i32, i32) {
    %c0_i32 = arith.constant 0 : i32
    %c0_i32_0 = arith.constant 0 : i32
    return %arg0, %c0_i32 : i32, i32
  }
  func.func @transform_1(%arg0: i32, %arg1: i32) -> (i32, i32, i32) {
    %c0_i32 = arith.constant 0 : i32
    %c0_i32_0 = arith.constant 0 : i32
    %c0_i32_1 = arith.constant 0 : i32
    return %arg1, %c0_i32, %c0_i32_0 : i32, i32, i32
  }
  func.func @transform_2(%arg0: i32, %arg1: i32) -> (i32, i32, i32) {
    %c0_i32 = arith.constant 0 : i32
    %c0_i32_0 = arith.constant 0 : i32
    %c0_i32_1 = arith.constant 0 : i32
    return %arg1, %c0_i32, %c0_i32_0 : i32, i32, i32
  }
  func.func @transform_3(%arg0: i32, %arg1: i32) -> (i32, i32) {
    %c0_i32 = arith.constant 0 : i32
    %c0_i32_0 = arith.constant 0 : i32
    %c0_i32_1 = arith.constant 0 : i32
    return %c0_i32, %c0_i32_0 : i32, i32
  }
  func.func @transform_4(%arg0: i32, %arg1: i32) -> (i32, i32) {
    %c0_i32 = arith.constant 0 : i32
    %c0_i32_0 = arith.constant 0 : i32
    %c0_i32_1 = arith.constant 0 : i32
    return %c0_i32, %c0_i32_0 : i32, i32
  }
  func.func @transform_5(%arg0: i32, %arg1: i32) -> (i32, i32) {
    %c0_i32 = arith.constant 0 : i32
    %c0_i32_0 = arith.constant 0 : i32
    %c0_i32_1 = arith.constant 0 : i32
    return %c0_i32, %c0_i32_0 : i32, i32
  }
  func.func @transform_6(%arg0: i32, %arg1: i32) -> (i32, i32) {
    %c0_i32 = arith.constant 0 : i32
    %c0_i32_0 = arith.constant 0 : i32
    %c0_i32_1 = arith.constant 0 : i32
    return %c0_i32, %c0_i32_0 : i32, i32
  }
  func.func @transform_7(%arg0: i32, %arg1: i32) -> (i32, i32) {
    %c0_i32 = arith.constant 0 : i32
    %c0_i32_0 = arith.constant 0 : i32
    %c0_i32_1 = arith.constant 0 : i32
    return %c0_i32, %c0_i32_0 : i32, i32
  }
  func.func @transform_8(%arg0: i32, %arg1: i32) -> (i32, i32) {
    %c0_i32 = arith.constant 0 : i32
    %c0_i32_0 = arith.constant 0 : i32
    %c0_i32_1 = arith.constant 0 : i32
    return %c0_i32, %c0_i32_0 : i32, i32
  }
  func.func @transform_9(%arg0: i32, %arg1: i32) -> (i32, i32) {
    %c0_i32 = arith.constant 0 : i32
    %c0_i32_0 = arith.constant 0 : i32
    %c0_i32_1 = arith.constant 0 : i32
    return %c0_i32, %c0_i32_0 : i32, i32
  }
  func.func @transform_10(%arg0: i32, %arg1: i32) -> (i32, i32) {
    %c0_i32 = arith.constant 0 : i32
    %c0_i32_0 = arith.constant 0 : i32
    %c0_i32_1 = arith.constant 0 : i32
    return %c0_i32, %c0_i32_0 : i32, i32
  }
  func.func @transform_11(%arg0: i32, %arg1: i32) -> (i32, i32) {
    %c0_i32 = arith.constant 0 : i32
    %c0_i32_0 = arith.constant 0 : i32
    %c0_i32_1 = arith.constant 0 : i32
    return %c0_i32, %c0_i32_0 : i32, i32
  }
  func.func @transform_12(%arg0: i32, %arg1: i32) -> (i32, i32, i32) {
    %c0_i32 = arith.constant 0 : i32
    %c0_i32_0 = arith.constant 0 : i32
    return %arg1, %c0_i32, %arg0 : i32, i32, i32
  }
}

</mosaic_0001>

<llo_original>
// kernel: tpu_custom_call.1
$region0: #{tpu_custom_call.1}
  #allocation0 [shape = 'u32[]', space=smem, size = 0x4, offset = 0x4, fixed_abs, tag = 'smem constant byte address 0x4 - core index']
  #allocation1 [shape = 'u32[144,128]{1,0:T(1,128)}', space=vmem, size = 0x12000, scoped, tag = 'internal scratch']
  %s0 = inlined_call_operand.vmem [shape: bf16[128,128], index: 0, kind: input, shape index: {}]
  %s1 = inlined_call_operand.vmem [shape: bf16[2,1,128], index: 1, kind: input, shape index: {}]
  %s2 = inlined_call_operand.vmem [shape: bf16[2,1,128], index: 2, kind: input, shape index: {}]
  %s3 = inlined_call_operand.hbm [shape: bf16[128,128], index: 3, kind: input, shape index: {}]
  %s4 = inlined_call_operand.vmem [shape: f32[1,128], index: 4, kind: input, shape index: {}]
  %s5 = inlined_call_operand.vmem [shape: bf16[128,3], index: 5, kind: input, shape index: {}]
  %s6 = inlined_call_operand.vmem [shape: f32[1,3], index: 6, kind: input, shape index: {}]
  %s7 = inlined_call_operand.vmem [shape: bf16[3,128], index: 7, kind: input, shape index: {}]
  %s8 = inlined_call_operand.hbm [shape: bf16[128,128], index: 8, kind: input, shape index: {}]
  %s9 = inlined_call_operand.vmem [shape: f32[1,128], index: 9, kind: input, shape index: {}]
  %s10 = inlined_call_operand.vmem [shape: bf16[3,128], index: 10, kind: input, shape index: {}]
  %s11 = inlined_call_operand.vmem [shape: f32[3,1], index: 11, kind: input, shape index: {}]
  %s12 = inlined_call_operand.vmem [shape: f32[2,3,128], index: 12, kind: output, shape index: {}]
  %s13 = sld [smem:[#allocation0]]
  $region89: #{tpu_custom_call.1} parent=0
    _
  %s15 = ssub.s32 1, %s13
  %s16 = scalar_select 0, %s15, %s13
  $region1: #{tpu_custom_call.1} parent=0
    #allocation2 [shape = 'u8[32768]{0}', space=vmem, size = 0x8000, scoped, tag = 'input window, operand 3, single buffered']
    #allocation3 [shape = 's32[2]{0}', space=sflag, size = 0x8, scoped, tag = 'scoped memory for tpu_custom_call.1']
    #allocation4 [shape = 'u8[32768]{0}', space=vmem, size = 0x8000, scoped, tag = 'input window, operand 8, single buffered']
    #allocation5 [shape = 's32[1]{0}', space=sflag, size = 0x4, scoped, tag = 'scoped memory for tpu_custom_call.1']
    %17 = vsyncpa [#allocation3], 0
    %18 = vsyncpa [#allocation5], 0
    loop: start=0, step=1, limit=4
    $region2: #{tpu_custom_call.1} parent=1 // loop_pre_header
      _
    $region3: #{tpu_custom_call.1} parent=1 // loop_header
      %s20 = sphi 0, %s24
      %p21 = scmp.ge.s32.totalorder %s20, 4
      %s27 = sphi 0, %s39
      %s28 = sphi 0, %s35
      %s29 = sphi 0, %s27
      %s30 = sphi 0, %s28
      %s31 = sphi 0, %s29
      %s32 = sphi 0, %s30
      %s42 = sphi 0, %s44
      %s45 = sphi 0, %s42
      %s46 = sphi 0, %s45
      %s62 = sphi 0, %s46
      %s68 = sphi 0, %s70
      %s71 = sphi 0, %s68
      %s72 = sphi 0, %s71
      %s88 = sphi 0, %s72
      %s94 = sphi 0, %s96
      %s97 = sphi 0, %s94
      %s98 = sphi 0, %s97
      %s114 = sphi 0, %s98
      %s118 = sphi 0, %s118
      %s120 = sphi 0, %s118
      %s121 = sphi 0, %s120
      %s135 = sphi 0, %s121
      %s139 = sphi 0, %s139
      %s141 = sphi 0, %s139
      %s142 = sphi 0, %s141
      %s156 = sphi 0, %s142
      %s160 = sphi 0, %s160
      %s162 = sphi 0, %s160
      %s163 = sphi 0, %s162
      %s177 = sphi 0, %s163
      %s181 = sphi 0, %s181
      %s183 = sphi 0, %s181
      %s184 = sphi 0, %s183
      %s198 = sphi 0, %s184
      %s202 = sphi 0, %s202
      %s204 = sphi 0, %s202
      %s205 = sphi 0, %s204
      %s219 = sphi 0, %s205
      %s223 = sphi 0, %s223
      %s225 = sphi 0, %s223
      %s226 = sphi 0, %s225
      %s240 = sphi 0, %s226
      %s244 = sphi 0, %s244
      %s246 = sphi 0, %s244
      %s247 = sphi 0, %s246
      %s261 = sphi 0, %s247
      %s265 = sphi 0, %s265
      %s267 = sphi 0, %s265
      %s268 = sphi 0, %s267
      %s282 = sphi 0, %s268
      %s286 = sphi 0, %s286
      %s288 = sphi 0, %s286
      %s289 = sphi 0, %s288
      %s303 = sphi 0, %s289
      %s311 = sphi 0, %s313
      %s314 = sphi 0, %s311
      %s315 = sphi 0, %s314
      %s331 = sphi 0, %s315
    $region4: #{tpu_custom_call.1} parent=1 // loop_header_branch
      %23 = sbr.rel (%p21) target = $region8
    $region5: #{tpu_custom_call.1} parent=1 // loop_body
      %s25 = ssub.s32 %s20, 1
      %s26 = ssub.s32 %s20, 2
      %s33 = sadd.s32 1, %s28
      %p34 = scmp.ge.s32.totalorder %s33, 2
      %s35 = scalar_select %p34, 0, %s33
      %s36 = sadd.s32 1, %s27
      %s37 = scalar_select %p34, %s36, %s27
      %p38 = scmp.ge.s32.totalorder %s37, 1
      %s39 = scalar_select %p38, 0, %s37
      %s40 = ssub.s32 %s27, %s39
      %p41 = scmp.eq.s32.totalorder %s40, 0
      %s43 = sadd.s32 %s42, 1
      %s44 = scalar_select %p41, %s42, %s43
      %p47 = pneg %p41
      %p48 = scmp.eq.s32.totalorder %s20, 1
      %p49 = por %p47, %p48
      %p50 = scmp.ne.s32.totalorder %s42, %s45
      %p51 = scmp.eq.s32.totalorder %s20, 0
      %p52 = por %p50, %p51
      %p53 = scmp.ne.s32.totalorder %s42, %s45
      %p54 = scmp.eq.s32.totalorder %s25, 1
      %p55 = por %p53, %p54
      %p56 = scmp.ne.s32.totalorder %s45, %s46
      %p57 = scmp.eq.s32.totalorder %s25, 0
      %p58 = por %p56, %p57
      %p59 = scmp.ne.s32.totalorder %s45, %s46
      %p60 = scmp.eq.s32.totalorder %s26, 1
      %p61 = por %p59, %p60
      %p63 = scmp.ne.s32.totalorder %s46, %s62
      %p64 = scmp.eq.s32.totalorder %s26, 0
      %p65 = por %p63, %p64
      %s66 = ssub.s32 %s28, %s35
      %p67 = scmp.eq.s32.totalorder %s66, 0
      %s69 = sadd.s32 %s68, 1
      %s70 = scalar_select %p67, %s68, %s69
      %p73 = pneg %p67
      %p74 = scmp.eq.s32.totalorder %s20, 1
      %p75 = por %p73, %p74
      %p76 = scmp.ne.s32.totalorder %s68, %s71
      %p77 = scmp.eq.s32.totalorder %s20, 0
      %p78 = por %p76, %p77
      %p79 = scmp.ne.s32.totalorder %s68, %s71
      %p80 = scmp.eq.s32.totalorder %s25, 1
      %p81 = por %p79, %p80
      %p82 = scmp.ne.s32.totalorder %s71, %s72
      %p83 = scmp.eq.s32.totalorder %s25, 0
      %p84 = por %p82, %p83
      %p85 = scmp.ne.s32.totalorder %s71, %s72
      %p86 = scmp.eq.s32.totalorder %s26, 1
      %p87 = por %p85, %p86
      %p89 = scmp.ne.s32.totalorder %s72, %s88
      %p90 = scmp.eq.s32.totalorder %s26, 0
      %p91 = por %p89, %p90
      %s92 = ssub.s32 %s28, %s35
      %p93 = scmp.eq.s32.totalorder %s92, 0
      %s95 = sadd.s32 %s94, 1
      %s96 = scalar_select %p93, %s94, %s95
      %p99 = pneg %p93
      %p100 = scmp.eq.s32.totalorder %s20, 1
      %p101 = por %p99, %p100
      %p102 = scmp.ne.s32.totalorder %s94, %s97
      %p103 = scmp.eq.s32.totalorder %s20, 0
      %p104 = por %p102, %p103
      %p105 = scmp.ne.s32.totalorder %s94, %s97
      %p106 = scmp.eq.s32.totalorder %s25, 1
      %p107 = por %p105, %p106
      %p108 = scmp.ne.s32.totalorder %s97, %s98
      %p109 = scmp.eq.s32.totalorder %s25, 0
      %p110 = por %p108, %p109
      %p111 = scmp.ne.s32.totalorder %s97, %s98
      %p112 = scmp.eq.s32.totalorder %s26, 1
      %p113 = por %p111, %p112
      %p115 = scmp.ne.s32.totalorder %s98, %s114
      %p116 = scmp.eq.s32.totalorder %s26, 0
      %p117 = por %p115, %p116
      %s119 = sadd.s32 %s118, 1
      %p122 = scmp.eq.s32.totalorder %s20, 1
      %p123 = scmp.ne.s32.totalorder %s118, %s120
      %p124 = scmp.eq.s32.totalorder %s20, 0
      %p125 = por %p123, %p124
      %p126 = scmp.ne.s32.totalorder %s118, %s120
      %p127 = scmp.eq.s32.totalorder %s25, 1
      %p128 = por %p126, %p127
      %p129 = scmp.ne.s32.totalorder %s120, %s121
      %p130 = scmp.eq.s32.totalorder %s25, 0
      %p131 = por %p129, %p130
      %p132 = scmp.ne.s32.totalorder %s120, %s121
      %p133 = scmp.eq.s32.totalorder %s26, 1
      %p134 = por %p132, %p133
      %p136 = scmp.ne.s32.totalorder %s121, %s135
      %p137 = scmp.eq.s32.totalorder %s26, 0
      %p138 = por %p136, %p137
      %s140 = sadd.s32 %s139, 1
      %p143 = scmp.eq.s32.totalorder %s20, 1
      %p144 = scmp.ne.s32.totalorder %s139, %s141
      %p145 = scmp.eq.s32.totalorder %s20, 0
      %p146 = por %p144, %p145
      %p147 = scmp.ne.s32.totalorder %s139, %s141
      %p148 = scmp.eq.s32.totalorder %s25, 1
      %p149 = por %p147, %p148
      %p150 = scmp.ne.s32.totalorder %s141, %s142
      %p151 = scmp.eq.s32.totalorder %s25, 0
      %p152 = por %p150, %p151
      %p153 = scmp.ne.s32.totalorder %s141, %s142
      %p154 = scmp.eq.s32.totalorder %s26, 1
      %p155 = por %p153, %p154
      %p157 = scmp.ne.s32.totalorder %s142, %s156
      %p158 = scmp.eq.s32.totalorder %s26, 0
      %p159 = por %p157, %p158
      %s161 = sadd.s32 %s160, 1
      %p164 = scmp.eq.s32.totalorder %s20, 1
      %p165 = scmp.ne.s32.totalorder %s160, %s162
      %p166 = scmp.eq.s32.totalorder %s20, 0
      %p167 = por %p165, %p166
      %p168 = scmp.ne.s32.totalorder %s160, %s162
      %p169 = scmp.eq.s32.totalorder %s25, 1
      %p170 = por %p168, %p169
      %p171 = scmp.ne.s32.totalorder %s162, %s163
      %p172 = scmp.eq.s32.totalorder %s25, 0
      %p173 = por %p171, %p172
      %p174 = scmp.ne.s32.totalorder %s162, %s163
      %p175 = scmp.eq.s32.totalorder %s26, 1
      %p176 = por %p174, %p175
      %p178 = scmp.ne.s32.totalorder %s163, %s177
      %p179 = scmp.eq.s32.totalorder %s26, 0
      %p180 = por %p178, %p179
      %s182 = sadd.s32 %s181, 1
      %p185 = scmp.eq.s32.totalorder %s20, 1
      %p186 = scmp.ne.s32.totalorder %s181, %s183
      %p187 = scmp.eq.s32.totalorder %s20, 0
      %p188 = por %p186, %p187
      %p189 = scmp.ne.s32.totalorder %s181, %s183
      %p190 = scmp.eq.s32.totalorder %s25, 1
      %p191 = por %p189, %p190
      %p192 = scmp.ne.s32.totalorder %s183, %s184
      %p193 = scmp.eq.s32.totalorder %s25, 0
      %p194 = por %p192, %p193
      %p195 = scmp.ne.s32.totalorder %s183, %s184
      %p196 = scmp.eq.s32.totalorder %s26, 1
      %p197 = por %p195, %p196
      %p199 = scmp.ne.s32.totalorder %s184, %s198
      %p200 = scmp.eq.s32.totalorder %s26, 0
      %p201 = por %p199, %p200
      %s203 = sadd.s32 %s202, 1
      %p206 = scmp.eq.s32.totalorder %s20, 1
      %p207 = scmp.ne.s32.totalorder %s202, %s204
      %p208 = scmp.eq.s32.totalorder %s20, 0
      %p209 = por %p207, %p208
      %p210 = scmp.ne.s32.totalorder %s202, %s204
      %p211 = scmp.eq.s32.totalorder %s25, 1
      %p212 = por %p210, %p211
      %p213 = scmp.ne.s32.totalorder %s204, %s205
      %p214 = scmp.eq.s32.totalorder %s25, 0
      %p215 = por %p213, %p214
      %p216 = scmp.ne.s32.totalorder %s204, %s205
      %p217 = scmp.eq.s32.totalorder %s26, 1
      %p218 = por %p216, %p217
      %p220 = scmp.ne.s32.totalorder %s205, %s219
      %p221 = scmp.eq.s32.totalorder %s26, 0
      %p222 = por %p220, %p221
      %s224 = sadd.s32 %s223, 1
      %p227 = scmp.eq.s32.totalorder %s20, 1
      %p228 = scmp.ne.s32.totalorder %s223, %s225
      %p229 = scmp.eq.s32.totalorder %s20, 0
      %p230 = por %p228, %p229
      %p231 = scmp.ne.s32.totalorder %s223, %s225
      %p232 = scmp.eq.s32.totalorder %s25, 1
      %p233 = por %p231, %p232
      %p234 = scmp.ne.s32.totalorder %s225, %s226
      %p235 = scmp.eq.s32.totalorder %s25, 0
      %p236 = por %p234, %p235
      %p237 = scmp.ne.s32.totalorder %s225, %s226
      %p238 = scmp.eq.s32.totalorder %s26, 1
      %p239 = por %p237, %p238
      %p241 = scmp.ne.s32.totalorder %s226, %s240
      %p242 = scmp.eq.s32.totalorder %s26, 0
      %p243 = por %p241, %p242
      %s245 = sadd.s32 %s244, 1
      %p248 = scmp.eq.s32.totalorder %s20, 1
      %p249 = scmp.ne.s32.totalorder %s244, %s246
      %p250 = scmp.eq.s32.totalorder %s20, 0
      %p251 = por %p249, %p250
      %p252 = scmp.ne.s32.totalorder %s244, %s246
      %p253 = scmp.eq.s32.totalorder %s25, 1
      %p254 = por %p252, %p253
      %p255 = scmp.ne.s32.totalorder %s246, %s247
      %p256 = scmp.eq.s32.totalorder %s25, 0
      %p257 = por %p255, %p256
      %p258 = scmp.ne.s32.totalorder %s246, %s247
      %p259 = scmp.eq.s32.totalorder %s26, 1
      %p260 = por %p258, %p259
      %p262 = scmp.ne.s32.totalorder %s247, %s261
      %p263 = scmp.eq.s32.totalorder %s26, 0
      %p264 = por %p262, %p263
      %s266 = sadd.s32 %s265, 1
      %p269 = scmp.eq.s32.totalorder %s20, 1
      %p270 = scmp.ne.s32.totalorder %s265, %s267
      %p271 = scmp.eq.s32.totalorder %s20, 0
      %p272 = por %p270, %p271
      %p273 = scmp.ne.s32.totalorder %s265, %s267
      %p274 = scmp.eq.s32.totalorder %s25, 1
      %p275 = por %p273, %p274
      %p276 = scmp.ne.s32.totalorder %s267, %s268
      %p277 = scmp.eq.s32.totalorder %s25, 0
      %p278 = por %p276, %p277
      %p279 = scmp.ne.s32.totalorder %s267, %s268
      %p280 = scmp.eq.s32.totalorder %s26, 1
      %p281 = por %p279, %p280
      %p283 = scmp.ne.s32.totalorder %s268, %s282
      %p284 = scmp.eq.s32.totalorder %s26, 0
      %p285 = por %p283, %p284
      %s287 = sadd.s32 %s286, 1
      %p290 = scmp.eq.s32.totalorder %s20, 1
      %p291 = scmp.ne.s32.totalorder %s286, %s288
      %p292 = scmp.eq.s32.totalorder %s20, 0
      %p293 = por %p291, %p292
      %p294 = scmp.ne.s32.totalorder %s286, %s288
      %p295 = scmp.eq.s32.totalorder %s25, 1
      %p296 = por %p294, %p295
      %p297 = scmp.ne.s32.totalorder %s288, %s289
      %p298 = scmp.eq.s32.totalorder %s25, 0
      %p299 = por %p297, %p298
      %p300 = scmp.ne.s32.totalorder %s288, %s289
      %p301 = scmp.eq.s32.totalorder %s26, 1
      %p302 = por %p300, %p301
      %p304 = scmp.ne.s32.totalorder %s289, %s303
      %p305 = scmp.eq.s32.totalorder %s26, 0
      %p306 = por %p304, %p305
      %s307 = ssub.s32 %s28, %s35
      %s308 = ssub.s32 %s27, %s39
      %s309 = sor.u32 %s307, %s308
      %p310 = scmp.eq.s32.totalorder %s309, 0
      %s312 = sadd.s32 %s311, 1
      %s313 = scalar_select %p310, %s311, %s312
      %p316 = pneg %p310
      %p317 = scmp.eq.s32.totalorder %s20, 1
      %p318 = por %p316, %p317
      %p319 = scmp.ne.s32.totalorder %s311, %s314
      %p320 = scmp.eq.s32.totalorder %s20, 0
      %p321 = por %p319, %p320
      %p322 = scmp.ne.s32.totalorder %s311, %s314
      %p323 = scmp.eq.s32.totalorder %s25, 1
      %p324 = por %p322, %p323
      %p325 = scmp.ne.s32.totalorder %s314, %s315
      %p326 = scmp.eq.s32.totalorder %s25, 0
      %p327 = por %p325, %p326
      %p328 = scmp.ne.s32.totalorder %s314, %s315
      %p329 = scmp.eq.s32.totalorder %s26, 1
      %p330 = por %p328, %p329
      %p332 = scmp.ne.s32.totalorder %s315, %s331
      %p333 = scmp.eq.s32.totalorder %s26, 0
      %p334 = por %p332, %p333
      %p335 = scmp.le.s32.totalorder 1, %s20
      %p336 = scmp.lt.s32.totalorder %s20, 3
      %p337 = pnand %p335, %p336
      %p338 = pneg %p337
      // Predicated region
      $region9: #{tpu_custom_call.1} parent=5 // pred_check
        _
      $region10: #{tpu_custom_call.1} parent=5 // pred_check_branch
        %340 = sbr.rel (%p337) target = $region12
      $region11: #{tpu_custom_call.1} parent=5 // pred_region
        %s341 = ssub.s32 %s20, 1
        // Predicated region
        $region13: #{tpu_custom_call.1} parent=11 // pred_check
          %p342 = pneg %p58
        $region14: #{tpu_custom_call.1} parent=11 // pred_check_branch
          %344 = sbr.rel (%p342) target = $region16
        $region15: #{tpu_custom_call.1} parent=11 // pred_region
          %s345 = smul.u32 16, %s29
          %p346 = scmp.lt.s32.totalorder %s345, 15
          %s347 = scalar_select %p346, %s345, 15
          %s348 = smul.addr %s347, 4
          %s349 = scalar_lea.vmem %s0, %s348
          %s350 = smul.u32 16, %s29
        $region16: #{tpu_custom_call.1} parent=11 // pred_fallthru
          _
        // Predicated region
        $region17: #{tpu_custom_call.1} parent=11 // pred_check
          %p351 = pneg %p131
        $region18: #{tpu_custom_call.1} parent=11 // pred_check_branch
          %353 = sbr.rel (%p351) target = $region20
        $region19: #{tpu_custom_call.1} parent=11 // pred_region
          %s355 = ssub.s32 1024, 1024
          %356 = vsyncadd [#allocation3], %s355
          %s357 = sshll.u32 [#allocation2], 4
          %s358 = int_to_ptr.vmem [resolvable:$true] %s357
          %363 = dma.hbm_to_vmem [thread:$0]  %s3, 1024, %s358, [#allocation3], 64, 64, 4
        $region20: #{tpu_custom_call.1} parent=11 // pred_fallthru
          _
        // Predicated region
        $region21: #{tpu_custom_call.1} parent=11 // pred_check
          %p364 = pneg %p152
        $region22: #{tpu_custom_call.1} parent=11 // pred_check_branch
          %366 = sbr.rel (%p364) target = $region24
        $region23: #{tpu_custom_call.1} parent=11 // pred_region
          _
        $region24: #{tpu_custom_call.1} parent=11 // pred_fallthru
          _
        // Predicated region
        $region25: #{tpu_custom_call.1} parent=11 // pred_check
          %p367 = pneg %p173
        $region26: #{tpu_custom_call.1} parent=11 // pred_check_branch
          %369 = sbr.rel (%p367) target = $region28
        $region27: #{tpu_custom_call.1} parent=11 // pred_region
          _
        $region28: #{tpu_custom_call.1} parent=11 // pred_fallthru
          _
        // Predicated region
        $region29: #{tpu_custom_call.1} parent=11 // pred_check
          %p370 = pneg %p194
        $region30: #{tpu_custom_call.1} parent=11 // pred_check_branch
          %372 = sbr.rel (%p370) target = $region32
        $region31: #{tpu_custom_call.1} parent=11 // pred_region
          _
        $region32: #{tpu_custom_call.1} parent=11 // pred_fallthru
          _
        // Predicated region
        $region33: #{tpu_custom_call.1} parent=11 // pred_check
          %p373 = pneg %p215
        $region34: #{tpu_custom_call.1} parent=11 // pred_check_branch
          %375 = sbr.rel (%p373) target = $region36
        $region35: #{tpu_custom_call.1} parent=11 // pred_region
          _
        $region36: #{tpu_custom_call.1} parent=11 // pred_fallthru
          _
        // Predicated region
        $region37: #{tpu_custom_call.1} parent=11 // pred_check
          %p376 = pneg %p236
        $region38: #{tpu_custom_call.1} parent=11 // pred_check_branch
          %378 = sbr.rel (%p376) target = $region40
        $region39: #{tpu_custom_call.1} parent=11 // pred_region
          %s380 = ssub.s32 1024, 1024
          %381 = vsyncadd [#allocation5], %s380
          %s382 = sshll.u32 [#allocation4], 4
          %s383 = int_to_ptr.vmem [resolvable:$true] %s382
          %388 = dma.hbm_to_vmem [thread:$0]  %s8, 1024, %s383, [#allocation5], 64, 64, 4
        $region40: #{tpu_custom_call.1} parent=11 // pred_fallthru
          _
        // Predicated region
        $region41: #{tpu_custom_call.1} parent=11 // pred_check
          %p389 = pneg %p257
        $region42: #{tpu_custom_call.1} parent=11 // pred_check_branch
          %391 = sbr.rel (%p389) target = $region44
        $region43: #{tpu_custom_call.1} parent=11 // pred_region
          _
        $region44: #{tpu_custom_call.1} parent=11 // pred_fallthru
          _
        // Predicated region
        $region45: #{tpu_custom_call.1} parent=11 // pred_check
          %p392 = pneg %p278
        $region46: #{tpu_custom_call.1} parent=11 // pred_check_branch
          %394 = sbr.rel (%p392) target = $region48
        $region47: #{tpu_custom_call.1} parent=11 // pred_region
          _
        $region48: #{tpu_custom_call.1} parent=11 // pred_fallthru
          _
        // Predicated region
        $region49: #{tpu_custom_call.1} parent=11 // pred_check
          %p395 = pneg %p299
        $region50: #{tpu_custom_call.1} parent=11 // pred_check_branch
          %397 = sbr.rel (%p395) target = $region52
        $region51: #{tpu_custom_call.1} parent=11 // pred_region
          _
        $region52: #{tpu_custom_call.1} parent=11 // pred_fallthru
          _
      $region12: #{tpu_custom_call.1} parent=5 // pred_fallthru
        _
      %p398 = scmp.lt.s32.totalorder %s20, 2
      // Predicated region
      $region53: #{tpu_custom_call.1} parent=5 // pred_check
        %p399 = pneg %p398
      $region54: #{tpu_custom_call.1} parent=5 // pred_check_branch
        %401 = sbr.rel (%p399) target = $region56
      $region55: #{tpu_custom_call.1} parent=5 // pred_region
        // Predicated region
        $region57: #{tpu_custom_call.1} parent=55 // pred_check
          %p402 = pneg %p78
        $region58: #{tpu_custom_call.1} parent=55 // pred_check_branch
          %404 = sbr.rel (%p402) target = $region60
        $region59: #{tpu_custom_call.1} parent=55 // pred_region
          %p405 = scmp.lt.s32.totalorder %s28, 1
          %s406 = scalar_select %p405, %s28, 1
          %s407 = scalar_lea.vmem %s1, %s406
        $region60: #{tpu_custom_call.1} parent=55 // pred_fallthru
          _
        // Predicated region
        $region61: #{tpu_custom_call.1} parent=55 // pred_check
          %p408 = pneg %p104
        $region62: #{tpu_custom_call.1} parent=55 // pred_check_branch
          %410 = sbr.rel (%p408) target = $region64
        $region63: #{tpu_custom_call.1} parent=55 // pred_region
          %p411 = scmp.lt.s32.totalorder %s28, 1
          %s412 = scalar_select %p411, %s28, 1
          %s413 = scalar_lea.vmem %s2, %s412
        $region64: #{tpu_custom_call.1} parent=55 // pred_fallthru
          _
      $region56: #{tpu_custom_call.1} parent=5 // pred_fallthru
        _
      %p414 = scmp.le.s32.totalorder 1, %s20
      %p415 = scmp.lt.s32.totalorder %s20, 3
      %p416 = pnand %p414, %p415
      %p417 = pneg %p416
      // Predicated region
      $region65: #{tpu_custom_call.1} parent=5 // pred_check
        _
      $region66: #{tpu_custom_call.1} parent=5 // pred_check_branch
        %419 = sbr.rel (%p416) target = $region68
      $region67: #{tpu_custom_call.1} parent=5 // pred_region
        %s420 = ssub.s32 %s20, 1
        // Predicated region
        $region69: #{tpu_custom_call.1} parent=67 // pred_check
          %p421 = pneg %p131
        $region70: #{tpu_custom_call.1} parent=67 // pred_check_branch
          %423 = sbr.rel (%p421) target = $region72
        $region71: #{tpu_custom_call.1} parent=67 // pred_region
          %424 = dma.done [#allocation3], 1024
        $region72: #{tpu_custom_call.1} parent=67 // pred_fallthru
          _
        // Predicated region
        $region73: #{tpu_custom_call.1} parent=67 // pred_check
          %p425 = pneg %p236
        $region74: #{tpu_custom_call.1} parent=67 // pred_check_branch
          %427 = sbr.rel (%p425) target = $region76
        $region75: #{tpu_custom_call.1} parent=67 // pred_region
          %428 = dma.done [#allocation5], 1024
        $region76: #{tpu_custom_call.1} parent=67 // pred_fallthru
          _
        %s429 = smul.u32 16, %s29
        %p430 = scmp.lt.s32.totalorder %s429, 15
        %s431 = scalar_select %p430, %s429, 15
        %s432 = smul.addr %s431, 4
        %s433 = scalar_lea.vmem %s0, %s432
        %p434 = pneg %p58
        %p435 = pneg %p55
        %p436 = scmp.lt.s32.totalorder %s30, 1
        %s437 = scalar_select %p436, %s30, 1
        %s438 = scalar_lea.vmem %s1, %s437
        %p439 = pneg %p84
        %p440 = pneg %p81
        %p441 = scmp.lt.s32.totalorder %s30, 1
        %s442 = scalar_select %p441, %s30, 1
        %s443 = scalar_lea.vmem %s2, %s442
        %p444 = pneg %p110
        %p445 = pneg %p107
        %p446 = pneg %p131
        %p447 = pneg %p128
        %p448 = pneg %p152
        %p449 = pneg %p149
        %p450 = pneg %p173
        %p451 = pneg %p170
        %p452 = pneg %p194
        %p453 = pneg %p191
        %p454 = pneg %p215
        %p455 = pneg %p212
        %p456 = pneg %p236
        %p457 = pneg %p233
        %p458 = pneg %p257
        %p459 = pneg %p254
        %p460 = pneg %p278
        %p461 = pneg %p275
        %p462 = pneg %p299
        %p463 = pneg %p296
        %p464 = pneg %p327
        %p465 = pneg %p324
        %p466 = scmp.lt.s32.totalorder %s30, 1
        %s467 = scalar_select %p466, %s30, 1
        %p468 = scmp.lt.s32.totalorder %s29, 0
        %s469 = scalar_select %p468, %s29, 0
        %s470 = sadd.s32 %s469, %s467
        %s471 = smul.addr %s470, 4
        %s472 = scalar_lea.vmem %s12, %s471
        %s473 = smul.u32 16, %s29
        %p474 = scmp.lt.s32.totalorder %s473, 15
        %s475 = scalar_select %p474, %s473, 15
        %s476 = smul.addr %s475, 4
        %s477 = scalar_lea.vmem %s0, %s476
        %s478 = smul.u32 16, %s29
        %p479 = scmp.lt.s32.totalorder %s30, 1
        %s480 = scalar_select %p479, %s30, 1
        %s481 = scalar_lea.vmem %s1, %s480
        %p482 = scmp.lt.s32.totalorder %s30, 1
        %s483 = scalar_select %p482, %s30, 1
        %s484 = scalar_lea.vmem %s2, %s483
        %p485 = scmp.lt.s32.totalorder %s30, 1
        %s486 = scalar_select %p485, %s30, 1
        %p487 = scmp.lt.s32.totalorder %s29, 0
        %s488 = scalar_select %p487, %s29, 0
        %s489 = sadd.s32 %s488, %s486
        %s490 = smul.addr %s489, 4
        %s491 = scalar_lea.vmem %s12, %s490
        %v493 = vld [vmem:[%s477] sm:$0xf]
        %v494 = vld [vmem:[%s477 + $0x4] sm:$0xf]
        %v495 = vld [vmem:[%s477 + $0x8] sm:$0xf]
        %v496 = vld [vmem:[%s477 + $0xc] sm:$0xf]
        %v497 = vld [vmem:[%s477 + $0x10] sm:$0xf]
        %v498 = vld [vmem:[%s477 + $0x14] sm:$0xf]
        %v499 = vld [vmem:[%s477 + $0x18] sm:$0xf]
        %v500 = vld [vmem:[%s477 + $0x1c] sm:$0xf]
        %v501 = vld [vmem:[%s477 + $0x20] sm:$0xf]
        %v502 = vld [vmem:[%s477 + $0x24] sm:$0xf]
        %v503 = vld [vmem:[%s477 + $0x28] sm:$0xf]
        %v504 = vld [vmem:[%s477 + $0x2c] sm:$0xf]
        %v505 = vld [vmem:[%s477 + $0x30] sm:$0xf]
        %v506 = vld [vmem:[%s477 + $0x34] sm:$0xf]
        %v507 = vld [vmem:[%s477 + $0x38] sm:$0xf]
        %v508 = vld [vmem:[%s477 + $0x3c] sm:$0xf]
        %v509 = vld [vmem:[%s481] sm:$0x1]
        %v511 = vpack.i.b16 %v509, %v509
        %v513 = vlaneseq
        %v514 = vshrl.u32 %v513, 7
        %v515 = vsub.s32 0, %v514
        %v516 = vrot.slane %v511, %v515
        %v518 = vunpack.c.l.b16 %v516
        %v519 = vpack.c.b16 %v518, %v518
        %v521 = vadd.bf16 %v493, %v519
        %v522 = vadd.bf16 %v494, %v519
        %v523 = vadd.bf16 %v495, %v519
        %v524 = vadd.bf16 %v496, %v519
        %v525 = vadd.bf16 %v497, %v519
        %v526 = vadd.bf16 %v498, %v519
        %v527 = vadd.bf16 %v499, %v519
        %v528 = vadd.bf16 %v500, %v519
        %v529 = vadd.bf16 %v501, %v519
        %v530 = vadd.bf16 %v502, %v519
        %v531 = vadd.bf16 %v503, %v519
        %v532 = vadd.bf16 %v504, %v519
        %v533 = vadd.bf16 %v505, %v519
        %v534 = vadd.bf16 %v506, %v519
        %v535 = vadd.bf16 %v507, %v519
        %v536 = vadd.bf16 %v508, %v519
        %v537 = vmax.bf16 %v521, 0
        %v538 = vmax.bf16 %v522, 0
        %v539 = vmax.bf16 %v523, 0
        %v540 = vmax.bf16 %v524, 0
        %v541 = vmax.bf16 %v525, 0
        %v542 = vmax.bf16 %v526, 0
        %v543 = vmax.bf16 %v527, 0
        %v544 = vmax.bf16 %v528, 0
        %v545 = vmax.bf16 %v529, 0
        %v546 = vmax.bf16 %v530, 0
        %v547 = vmax.bf16 %v531, 0
        %v548 = vmax.bf16 %v532, 0
        %v549 = vmax.bf16 %v533, 0
        %v550 = vmax.bf16 %v534, 0
        %v551 = vmax.bf16 %v535, 0
        %v552 = vmax.bf16 %v536, 0
        %v553 = vld [vmem:[#allocation2] sm:$0xf]
        %v554 = vld [vmem:[#allocation2 + $0x4] sm:$0xf]
        %v555 = vld [vmem:[#allocation2 + $0x8] sm:$0xf]
        %v556 = vld [vmem:[#allocation2 + $0xc] sm:$0xf]
        %v557 = vld [vmem:[#allocation2 + $0x10] sm:$0xf]
        %v558 = vld [vmem:[#allocation2 + $0x14] sm:$0xf]
        %v559 = vld [vmem:[#allocation2 + $0x18] sm:$0xf]
        %v560 = vld [vmem:[#allocation2 + $0x1c] sm:$0xf]
        %v561 = vld [vmem:[#allocation2 + $0x20] sm:$0xf]
        %v562 = vld [vmem:[#allocation2 + $0x24] sm:$0xf]
        %v563 = vld [vmem:[#allocation2 + $0x28] sm:$0xf]
        %v564 = vld [vmem:[#allocation2 + $0x2c] sm:$0xf]
        %v565 = vld [vmem:[#allocation2 + $0x30] sm:$0xf]
        %v566 = vld [vmem:[#allocation2 + $0x34] sm:$0xf]
        %v567 = vld [vmem:[#allocation2 + $0x38] sm:$0xf]
        %v568 = vld [vmem:[#allocation2 + $0x3c] sm:$0xf]
        %v569 = vld [vmem:[%s4] sm:$0x1]
        %v571 = vlaneseq
        %v572 = vshrl.u32 %v571, 7
        %v573 = vsub.s32 0, %v572
        %v574 = vrot.slane %v569, %v573
        %v592 = vunpack.c.l.b16 %v537
        %v593 = vunpack.c.l.b16 %v538
        %v594 = vunpack.c.l.b16 %v539
        %v595 = vunpack.c.l.b16 %v540
        %v596 = vunpack.c.l.b16 %v541
        %v597 = vunpack.c.l.b16 %v542
        %v598 = vunpack.c.l.b16 %v543
        %v599 = vunpack.c.l.b16 %v544
        %v600 = vunpack.c.l.b16 %v545
        %v601 = vunpack.c.l.b16 %v546
        %v602 = vunpack.c.l.b16 %v547
        %v603 = vunpack.c.l.b16 %v548
        %v604 = vunpack.c.l.b16 %v549
        %v605 = vunpack.c.l.b16 %v550
        %v606 = vunpack.c.l.b16 %v551
        %v607 = vunpack.c.l.b16 %v552
        %v608 = vpack.c.b16 %v593, %v592
        %v609 = vpack.c.b16 %v595, %v594
        %v610 = vpack.c.b16 %v597, %v596
        %v611 = vpack.c.b16 %v599, %v598
        %v612 = vpack.c.b16 %v601, %v600
        %v613 = vpack.c.b16 %v603, %v602
        %v614 = vpack.c.b16 %v605, %v604
        %v615 = vpack.c.b16 %v607, %v606
        %v640 = vunpack.c.l.b16 %v553
        %v641 = vunpack.c.l.b16 %v554
        %v642 = vunpack.c.l.b16 %v555
        %v643 = vunpack.c.l.b16 %v556
        %v644 = vunpack.c.l.b16 %v557
        %v645 = vunpack.c.l.b16 %v558
        %v646 = vunpack.c.l.b16 %v559
        %v647 = vunpack.c.l.b16 %v560
        %v648 = vunpack.c.l.b16 %v561
        %v649 = vunpack.c.l.b16 %v562
        %v650 = vunpack.c.l.b16 %v563
        %v651 = vunpack.c.l.b16 %v564
        %v652 = vunpack.c.l.b16 %v565
        %v653 = vunpack.c.l.b16 %v566
        %v654 = vunpack.c.l.b16 %v567
        %v655 = vunpack.c.l.b16 %v568
        %v656 = vpack.c.b16 %v641, %v640
        %v657 = vpack.c.b16 %v643, %v642
        %v658 = vpack.c.b16 %v645, %v644
        %v659 = vpack.c.b16 %v647, %v646
        %v660 = vpack.c.b16 %v649, %v648
        %v661 = vpack.c.b16 %v651, %v650
        %v662 = vpack.c.b16 %v653, %v652
        %v663 = vpack.c.b16 %v655, %v654
        %672 = vmatprep.subr.bf16.mxu0 0
        %673 = vmatpush1.bf16.msra.mxu0 %v656
        %674 = vmatprep.subr.bf16.mxu0 0
        %675 = vmatpush1.bf16.msra.mxu0 %v657
        %676 = vmatprep.subr.bf16.mxu0 0
        %677 = vmatpush1.bf16.msra.mxu0 %v658
        %678 = vmatprep.subr.bf16.mxu0 0
        %679 = vmatpush1.bf16.msra.mxu0 %v659
        %680 = vmatprep.subr.bf16.mxu0 0
        %681 = vmatpush1.bf16.msra.mxu0 %v660
        %682 = vmatprep.subr.bf16.mxu0 0
        %683 = vmatpush1.bf16.msra.mxu0 %v661
        %684 = vmatprep.subr.bf16.mxu0 0
        %685 = vmatpush1.bf16.msra.mxu0 %v662
        %686 = vmatprep.subr.bf16.mxu0 0
        %687 = vmatpush1.bf16.msra.mxu0 %v663
        %688 = vmatprep.subr.bf16.mxu0 0
        %689 = vmatpush1.bf16.msra.mxu0 0
        %690 = vmatprep.subr.bf16.mxu0 0
        %691 = vmatpush1.bf16.msra.mxu0 0
        %692 = vmatprep.subr.bf16.mxu0 0
        %693 = vmatpush1.bf16.msra.mxu0 0
        %694 = vmatprep.subr.bf16.mxu0 0
        %695 = vmatpush1.bf16.msra.mxu0 0
        %696 = vmatprep.subr.bf16.mxu0 0
        %697 = vmatpush1.bf16.msra.mxu0 0
        %698 = vmatprep.subr.bf16.mxu0 0
        %699 = vmatpush1.bf16.msra.mxu0 0
        %700 = vmatprep.subr.bf16.mxu0 0
        %701 = vmatpush1.bf16.msra.mxu0 0
        %702 = vmatprep.subr.bf16.mxu0 0
        %703 = vmatpush1.bf16.msra.mxu0 0
        %704 = vmatprep.mubr.bf16.mxu0 0
        %705 = vmatmul.mubr.bf16.gmra.mrb[0].mxu0 %v608
        %v706 = vpop.f32.mrb[0].mxu0
        %v707 = vadd.f32 %v574, %v706
        %v708 = vpop.f32.mrb[0].mxu0
        %v709 = vpop.f32.mrb[0].mxu0
        %v710 = vadd.f32 %v574, %v709
        %v711 = vpop.f32.mrb[0].mxu0
        %712 = vmatprep.mubr.bf16.mxu0 0
        %713 = vmatmul.mubr.bf16.gmra.mrb[0].mxu0 %v609
        %v714 = vpop.f32.mrb[0].mxu0
        %v715 = vadd.f32 %v574, %v714
        %v716 = vpop.f32.mrb[0].mxu0
        %v717 = vpop.f32.mrb[0].mxu0
        %v718 = vadd.f32 %v574, %v717
        %v719 = vpop.f32.mrb[0].mxu0
        %720 = vmatprep.mubr.bf16.mxu0 0
        %721 = vmatmul.mubr.bf16.gmra.mrb[0].mxu0 %v610
        %v722 = vpop.f32.mrb[0].mxu0
        %v723 = vadd.f32 %v574, %v722
        %v724 = vpop.f32.mrb[0].mxu0
        %v725 = vpop.f32.mrb[0].mxu0
        %v726 = vadd.f32 %v574, %v725
        %v727 = vpop.f32.mrb[0].mxu0
        %728 = vmatprep.mubr.bf16.mxu0 0
        %729 = vmatmul.mubr.bf16.gmra.mrb[0].mxu0 %v611
        %v730 = vpop.f32.mrb[0].mxu0
        %v731 = vadd.f32 %v574, %v730
        %v732 = vpop.f32.mrb[0].mxu0
        %v733 = vpop.f32.mrb[0].mxu0
        %v734 = vadd.f32 %v574, %v733
        %v735 = vpop.f32.mrb[0].mxu0
        %736 = vmatprep.mubr.bf16.mxu0 0
        %737 = vmatmul.mubr.bf16.gmra.mrb[0].mxu0 %v612
        %v738 = vpop.f32.mrb[0].mxu0
        %v739 = vadd.f32 %v574, %v738
        %v740 = vpop.f32.mrb[0].mxu0
        %v741 = vpop.f32.mrb[0].mxu0
        %v742 = vadd.f32 %v574, %v741
        %v743 = vpop.f32.mrb[0].mxu0
        %744 = vmatprep.mubr.bf16.mxu0 0
        %745 = vmatmul.mubr.bf16.gmra.mrb[0].mxu0 %v613
        %v746 = vpop.f32.mrb[0].mxu0
        %v747 = vadd.f32 %v574, %v746
        %v748 = vpop.f32.mrb[0].mxu0
        %v749 = vpop.f32.mrb[0].mxu0
        %v750 = vadd.f32 %v574, %v749
        %v751 = vpop.f32.mrb[0].mxu0
        %752 = vmatprep.mubr.bf16.mxu0 0
        %753 = vmatmul.mubr.bf16.gmra.mrb[0].mxu0 %v614
        %v754 = vpop.f32.mrb[0].mxu0
        %v755 = vadd.f32 %v574, %v754
        %v756 = vpop.f32.mrb[0].mxu0
        %v757 = vpop.f32.mrb[0].mxu0
        %v758 = vadd.f32 %v574, %v757
        %v759 = vpop.f32.mrb[0].mxu0
        %760 = vmatprep.mubr.bf16.mxu0 0
        %761 = vmatmul.mubr.bf16.gmra.mrb[0].mxu0 %v615
        %v762 = vpop.f32.mrb[0].mxu0
        %v763 = vadd.f32 %v574, %v762
        %v764 = vpop.f32.mrb[0].mxu0
        %v765 = vpop.f32.mrb[0].mxu0
        %v766 = vadd.f32 %v574, %v765
        %v767 = vpop.f32.mrb[0].mxu0
        %768 = vdwg.mxu0
        %v769 = vmax.f32 %v707, 0.0
        %v770 = vmax.f32 %v710, 0.0
        %v771 = vmax.f32 %v715, 0.0
        %v772 = vmax.f32 %v718, 0.0
        %v773 = vmax.f32 %v723, 0.0
        %v774 = vmax.f32 %v726, 0.0
        %v775 = vmax.f32 %v731, 0.0
        %v776 = vmax.f32 %v734, 0.0
        %v777 = vmax.f32 %v739, 0.0
        %v778 = vmax.f32 %v742, 0.0
        %v779 = vmax.f32 %v747, 0.0
        %v780 = vmax.f32 %v750, 0.0
        %v781 = vmax.f32 %v755, 0.0
        %v782 = vmax.f32 %v758, 0.0
        %v783 = vmax.f32 %v763, 0.0
        %v784 = vmax.f32 %v766, 0.0
        %v785 = vpack.c.bf16 %v770, %v769
        %v786 = vpack.c.bf16 %v772, %v771
        %v787 = vpack.c.bf16 %v774, %v773
        %v788 = vpack.c.bf16 %v776, %v775
        %v789 = vpack.c.bf16 %v778, %v777
        %v790 = vpack.c.bf16 %v780, %v779
        %v791 = vpack.c.bf16 %v782, %v781
        %v792 = vpack.c.bf16 %v784, %v783
        %v793 = vld [vmem:[%s5] sm:$0xf]
        %v794 = vld [vmem:[%s5 + $0x4] sm:$0xf]
        %v795 = vld [vmem:[%s5 + $0x8] sm:$0xf]
        %v796 = vld [vmem:[%s5 + $0xc] sm:$0xf]
        %v797 = vld [vmem:[%s5 + $0x10] sm:$0xf]
        %v798 = vld [vmem:[%s5 + $0x14] sm:$0xf]
        %v799 = vld [vmem:[%s5 + $0x18] sm:$0xf]
        %v800 = vld [vmem:[%s5 + $0x1c] sm:$0xf]
        %v801 = vld [vmem:[%s5 + $0x20] sm:$0xf]
        %v802 = vld [vmem:[%s5 + $0x24] sm:$0xf]
        %v803 = vld [vmem:[%s5 + $0x28] sm:$0xf]
        %v804 = vld [vmem:[%s5 + $0x2c] sm:$0xf]
        %v805 = vld [vmem:[%s5 + $0x30] sm:$0xf]
        %v806 = vld [vmem:[%s5 + $0x34] sm:$0xf]
        %v807 = vld [vmem:[%s5 + $0x38] sm:$0xf]
        %v808 = vld [vmem:[%s5 + $0x3c] sm:$0xf]
        %v809 = vld [vmem:[%s6] sm:$0x1]
        %v811 = vlaneseq
        %v812 = vshrl.u32 %v811, 7
        %v813 = vsub.s32 0, %v812
        %v814 = vrot.slane %v809, %v813
        %v832 = vunpack.c.l.b16 %v793
        %v833 = vunpack.c.l.b16 %v794
        %v834 = vunpack.c.l.b16 %v795
        %v835 = vunpack.c.l.b16 %v796
        %v836 = vunpack.c.l.b16 %v797
        %v837 = vunpack.c.l.b16 %v798
        %v838 = vunpack.c.l.b16 %v799
        %v839 = vunpack.c.l.b16 %v800
        %v840 = vunpack.c.l.b16 %v801
        %v841 = vunpack.c.l.b16 %v802
        %v842 = vunpack.c.l.b16 %v803
        %v843 = vunpack.c.l.b16 %v804
        %v844 = vunpack.c.l.b16 %v805
        %v845 = vunpack.c.l.b16 %v806
        %v846 = vunpack.c.l.b16 %v807
        %v847 = vunpack.c.l.b16 %v808
        %v848 = vpack.c.b16 %v833, %v832
        %v849 = vpack.c.b16 %v835, %v834
        %v850 = vpack.c.b16 %v837, %v836
        %v851 = vpack.c.b16 %v839, %v838
        %v852 = vpack.c.b16 %v841, %v840
        %v853 = vpack.c.b16 %v843, %v842
        %v854 = vpack.c.b16 %v845, %v844
        %v855 = vpack.c.b16 %v847, %v846
        %864 = vmatprep.subr.bf16.mxu0 0
        %865 = vmatpush1.bf16.msra.mxu0 %v848
        %866 = vmatprep.subr.bf16.mxu0 0
        %867 = vmatpush1.bf16.msra.mxu0 %v849
        %868 = vmatprep.subr.bf16.mxu0 0
        %869 = vmatpush1.bf16.msra.mxu0 %v850
        %870 = vmatprep.subr.bf16.mxu0 0
        %871 = vmatpush1.bf16.msra.mxu0 %v851
        %872 = vmatprep.subr.bf16.mxu0 0
        %873 = vmatpush1.bf16.msra.mxu0 %v852
        %874 = vmatprep.subr.bf16.mxu0 0
        %875 = vmatpush1.bf16.msra.mxu0 %v853
        %876 = vmatprep.subr.bf16.mxu0 0
        %877 = vmatpush1.bf16.msra.mxu0 %v854
        %878 = vmatprep.subr.bf16.mxu0 0
        %879 = vmatpush1.bf16.msra.mxu0 %v855
        %880 = vmatprep.subr.bf16.mxu0 0
        %881 = vmatpush1.bf16.msra.mxu0 0
        %882 = vmatprep.subr.bf16.mxu0 0
        %883 = vmatpush1.bf16.msra.mxu0 0
        %884 = vmatprep.subr.bf16.mxu0 0
        %885 = vmatpush1.bf16.msra.mxu0 0
        %886 = vmatprep.subr.bf16.mxu0 0
        %887 = vmatpush1.bf16.msra.mxu0 0
        %888 = vmatprep.subr.bf16.mxu0 0
        %889 = vmatpush1.bf16.msra.mxu0 0
        %890 = vmatprep.subr.bf16.mxu0 0
        %891 = vmatpush1.bf16.msra.mxu0 0
        %892 = vmatprep.subr.bf16.mxu0 0
        %893 = vmatpush1.bf16.msra.mxu0 0
        %894 = vmatprep.subr.bf16.mxu0 0
        %895 = vmatpush1.bf16.msra.mxu0 0
        %896 = vmatprep.mubr.bf16.mxu0 0
        %897 = vmatmul.mubr.bf16.gmra.mrb[0].mxu0 %v785
        %v898 = vpop.f32.mrb[0].mxu0
        %v899 = vadd.f32 %v814, %v898
        %v900 = vpop.f32.mrb[0].mxu0
        %v901 = vpop.f32.mrb[0].mxu0
        %v902 = vadd.f32 %v814, %v901
        %v903 = vpop.f32.mrb[0].mxu0
        %904 = vmatprep.mubr.bf16.mxu0 0
        %905 = vmatmul.mubr.bf16.gmra.mrb[0].mxu0 %v786
        %v906 = vpop.f32.mrb[0].mxu0
        %v907 = vadd.f32 %v814, %v906
        %v908 = vpop.f32.mrb[0].mxu0
        %v909 = vpop.f32.mrb[0].mxu0
        %v910 = vadd.f32 %v814, %v909
        %v911 = vpop.f32.mrb[0].mxu0
        %912 = vmatprep.mubr.bf16.mxu0 0
        %913 = vmatmul.mubr.bf16.gmra.mrb[0].mxu0 %v787
        %v914 = vpop.f32.mrb[0].mxu0
        %v915 = vadd.f32 %v814, %v914
        %v916 = vpop.f32.mrb[0].mxu0
        %v917 = vpop.f32.mrb[0].mxu0
        %v918 = vadd.f32 %v814, %v917
        %v919 = vpop.f32.mrb[0].mxu0
        %920 = vmatprep.mubr.bf16.mxu0 0
        %921 = vmatmul.mubr.bf16.gmra.mrb[0].mxu0 %v788
        %v922 = vpop.f32.mrb[0].mxu0
        %v923 = vadd.f32 %v814, %v922
        %v924 = vpop.f32.mrb[0].mxu0
        %v925 = vpop.f32.mrb[0].mxu0
        %v926 = vadd.f32 %v814, %v925
        %v927 = vpop.f32.mrb[0].mxu0
        %928 = vmatprep.mubr.bf16.mxu0 0
        %929 = vmatmul.mubr.bf16.gmra.mrb[0].mxu0 %v789
        %v930 = vpop.f32.mrb[0].mxu0
        %v931 = vadd.f32 %v814, %v930
        %v932 = vpop.f32.mrb[0].mxu0
        %v933 = vpop.f32.mrb[0].mxu0
        %v934 = vadd.f32 %v814, %v933
        %v935 = vpop.f32.mrb[0].mxu0
        %936 = vmatprep.mubr.bf16.mxu0 0
        %937 = vmatmul.mubr.bf16.gmra.mrb[0].mxu0 %v790
        %v938 = vpop.f32.mrb[0].mxu0
        %v939 = vadd.f32 %v814, %v938
        %v940 = vpop.f32.mrb[0].mxu0
        %v941 = vpop.f32.mrb[0].mxu0
        %v942 = vadd.f32 %v814, %v941
        %v943 = vpop.f32.mrb[0].mxu0
        %944 = vmatprep.mubr.bf16.mxu0 0
        %945 = vmatmul.mubr.bf16.gmra.mrb[0].mxu0 %v791
        %v946 = vpop.f32.mrb[0].mxu0
        %v947 = vadd.f32 %v814, %v946
        %v948 = vpop.f32.mrb[0].mxu0
        %v949 = vpop.f32.mrb[0].mxu0
        %v950 = vadd.f32 %v814, %v949
        %v951 = vpop.f32.mrb[0].mxu0
        %952 = vmatprep.mubr.bf16.mxu0 0
        %953 = vmatmul.mubr.bf16.gmra.mrb[0].mxu0 %v792
        %v954 = vpop.f32.mrb[0].mxu0
        %v955 = vadd.f32 %v814, %v954
        %v956 = vpop.f32.mrb[0].mxu0
        %v957 = vpop.f32.mrb[0].mxu0
        %v958 = vadd.f32 %v814, %v957
        %v959 = vpop.f32.mrb[0].mxu0
        %960 = vdwg.mxu0
        %v961 = vpack.c.bf16 %v902, %v899
        %v962 = vpack.c.bf16 %v910, %v907
        %v963 = vpack.c.bf16 %v918, %v915
        %v964 = vpack.c.bf16 %v926, %v923
        %v965 = vpack.c.bf16 %v934, %v931
        %v966 = vpack.c.bf16 %v942, %v939
        %v967 = vpack.c.bf16 %v950, %v947
        %v968 = vpack.c.bf16 %v958, %v955
        %v969 = vld [vmem:[%s7] sm:$0x3]
        %v970 = vld [vmem:[%s484] sm:$0x1]
        %v971 = vunpack.c.l.bf16 %v970
        %v972 = vlaneseq
        %v973 = vshrl.u32 %v972, 7
        %v974 = vsub.s32 0, %v973
        %v975 = vrot.slane %v971, %v974
        %vm976 = vcmask 23552
        %v978 = vsel %vm976, %v961, 0
        %v981 = vsel %vm976, %v962, 0
        %v984 = vsel %vm976, %v963, 0
        %v987 = vsel %vm976, %v964, 0
        %v990 = vsel %vm976, %v965, 0
        %v993 = vsel %vm976, %v966, 0
        %v996 = vsel %vm976, %v967, 0
        %v999 = vsel %vm976, %v968, 0
        %vm1001 = vcmask 1040384
        %vm1002 = vcmask 1041408
        %v1003 = vsel %vm1001, 4294967295, 65535
        %v1004 = vsel %vm1002, %v1003, 0
        %v1006 = vand.u32 %v969, %v1004
        %1008 = vmatprep.subr.bf16.mxu0 0
        %1009 = vmatpush1.bf16.msra.mxu0 %v1006
        %1010 = vmatprep.subr.bf16.mxu0 0
        %1011 = vmatpush1.bf16.msra.mxu0 0
        %1012 = vmatprep.subr.bf16.mxu0 0
        %1013 = vmatpush1.bf16.msra.mxu0 0
        %1014 = vmatprep.subr.bf16.mxu0 0
        %1015 = vmatpush1.bf16.msra.mxu0 0
        %1016 = vmatprep.subr.bf16.mxu0 0
        %1017 = vmatpush1.bf16.msra.mxu0 0
        %1018 = vmatprep.subr.bf16.mxu0 0
        %1019 = vmatpush1.bf16.msra.mxu0 0
        %1020 = vmatprep.subr.bf16.mxu0 0
        %1021 = vmatpush1.bf16.msra.mxu0 0
        %1022 = vmatprep.subr.bf16.mxu0 0
        %1023 = vmatpush1.bf16.msra.mxu0 0
        %1024 = vmatprep.subr.bf16.mxu0 0
        %1025 = vmatpush1.bf16.msra.mxu0 0
        %1026 = vmatprep.subr.bf16.mxu0 0
        %1027 = vmatpush1.bf16.msra.mxu0 0
        %1028 = vmatprep.subr.bf16.mxu0 0
        %1029 = vmatpush1.bf16.msra.mxu0 0
        %1030 = vmatprep.subr.bf16.mxu0 0
        %1031 = vmatpush1.bf16.msra.mxu0 0
        %1032 = vmatprep.subr.bf16.mxu0 0
        %1033 = vmatpush1.bf16.msra.mxu0 0
        %1034 = vmatprep.subr.bf16.mxu0 0
        %1035 = vmatpush1.bf16.msra.mxu0 0
        %1036 = vmatprep.subr.bf16.mxu0 0
        %1037 = vmatpush1.bf16.msra.mxu0 0
        %1038 = vmatprep.subr.bf16.mxu0 0
        %1039 = vmatpush1.bf16.msra.mxu0 0
        %1040 = vmatprep.mubr.bf16.mxu0 0
        %1041 = vmatmul.mubr.bf16.gmra.mrb[0].mxu0 %v978
        %v1042 = vpop.f32.mrb[0].mxu0
        %v1043 = vadd.f32 %v975, %v1042
        %v1044 = vpop.f32.mrb[0].mxu0
        %v1045 = vpop.f32.mrb[0].mxu0
        %v1046 = vadd.f32 %v975, %v1045
        %v1047 = vpop.f32.mrb[0].mxu0
        %1048 = vmatprep.mubr.bf16.mxu0 0
        %1049 = vmatmul.mubr.bf16.gmra.mrb[0].mxu0 %v981
        %v1050 = vpop.f32.mrb[0].mxu0
        %v1051 = vadd.f32 %v975, %v1050
        %v1052 = vpop.f32.mrb[0].mxu0
        %v1053 = vpop.f32.mrb[0].mxu0
        %v1054 = vadd.f32 %v975, %v1053
        %v1055 = vpop.f32.mrb[0].mxu0
        %1056 = vmatprep.mubr.bf16.mxu0 0
        %1057 = vmatmul.mubr.bf16.gmra.mrb[0].mxu0 %v984
        %v1058 = vpop.f32.mrb[0].mxu0
        %v1059 = vadd.f32 %v975, %v1058
        %v1060 = vpop.f32.mrb[0].mxu0
        %v1061 = vpop.f32.mrb[0].mxu0
        %v1062 = vadd.f32 %v975, %v1061
        %v1063 = vpop.f32.mrb[0].mxu0
        %1064 = vmatprep.mubr.bf16.mxu0 0
        %1065 = vmatmul.mubr.bf16.gmra.mrb[0].mxu0 %v987
        %v1066 = vpop.f32.mrb[0].mxu0
        %v1067 = vadd.f32 %v975, %v1066
        %v1068 = vpop.f32.mrb[0].mxu0
        %v1069 = vpop.f32.mrb[0].mxu0
        %v1070 = vadd.f32 %v975, %v1069
        %v1071 = vpop.f32.mrb[0].mxu0
        %1072 = vmatprep.mubr.bf16.mxu0 0
        %1073 = vmatmul.mubr.bf16.gmra.mrb[0].mxu0 %v990
        %v1074 = vpop.f32.mrb[0].mxu0
        %v1075 = vadd.f32 %v975, %v1074
        %v1076 = vpop.f32.mrb[0].mxu0
        %v1077 = vpop.f32.mrb[0].mxu0
        %v1078 = vadd.f32 %v975, %v1077
        %v1079 = vpop.f32.mrb[0].mxu0
        %1080 = vmatprep.mubr.bf16.mxu0 0
        %1081 = vmatmul.mubr.bf16.gmra.mrb[0].mxu0 %v993
        %v1082 = vpop.f32.mrb[0].mxu0
        %v1083 = vadd.f32 %v975, %v1082
        %v1084 = vpop.f32.mrb[0].mxu0
        %v1085 = vpop.f32.mrb[0].mxu0
        %v1086 = vadd.f32 %v975, %v1085
        %v1087 = vpop.f32.mrb[0].mxu0
        %1088 = vmatprep.mubr.bf16.mxu0 0
        %1089 = vmatmul.mubr.bf16.gmra.mrb[0].mxu0 %v996
        %v1090 = vpop.f32.mrb[0].mxu0
        %v1091 = vadd.f32 %v975, %v1090
        %v1092 = vpop.f32.mrb[0].mxu0
        %v1093 = vpop.f32.mrb[0].mxu0
        %v1094 = vadd.f32 %v975, %v1093
        %v1095 = vpop.f32.mrb[0].mxu0
        %1096 = vmatprep.mubr.bf16.mxu0 0
        %1097 = vmatmul.mubr.bf16.gmra.mrb[0].mxu0 %v999
        %v1098 = vpop.f32.mrb[0].mxu0
        %v1099 = vadd.f32 %v975, %v1098
        %v1100 = vpop.f32.mrb[0].mxu0
        %v1101 = vpop.f32.mrb[0].mxu0
        %v1102 = vadd.f32 %v975, %v1101
        %v1103 = vpop.f32.mrb[0].mxu0
        %1104 = vdwg.mxu0
        %v1105 = vmax.f32 %v1043, 0.0
        %v1106 = vmax.f32 %v1046, 0.0
        %v1107 = vmax.f32 %v1051, 0.0
        %v1108 = vmax.f32 %v1054, 0.0
        %v1109 = vmax.f32 %v1059, 0.0
        %v1110 = vmax.f32 %v1062, 0.0
        %v1111 = vmax.f32 %v1067, 0.0
        %v1112 = vmax.f32 %v1070, 0.0
        %v1113 = vmax.f32 %v1075, 0.0
        %v1114 = vmax.f32 %v1078, 0.0
        %v1115 = vmax.f32 %v1083, 0.0
        %v1116 = vmax.f32 %v1086, 0.0
        %v1117 = vmax.f32 %v1091, 0.0
        %v1118 = vmax.f32 %v1094, 0.0
        %v1119 = vmax.f32 %v1099, 0.0
        %v1120 = vmax.f32 %v1102, 0.0
        %v1121 = vpack.c.bf16 %v1106, %v1105
        %v1122 = vpack.c.bf16 %v1108, %v1107
        %v1123 = vpack.c.bf16 %v1110, %v1109
        %v1124 = vpack.c.bf16 %v1112, %v1111
        %v1125 = vpack.c.bf16 %v1114, %v1113
        %v1126 = vpack.c.bf16 %v1116, %v1115
        %v1127 = vpack.c.bf16 %v1118, %v1117
        %v1128 = vpack.c.bf16 %v1120, %v1119
        %v1129 = vld [vmem:[#allocation4] sm:$0xf]
        %v1130 = vld [vmem:[#allocation4 + $0x4] sm:$0xf]
        %v1131 = vld [vmem:[#allocation4 + $0x8] sm:$0xf]
        %v1132 = vld [vmem:[#allocation4 + $0xc] sm:$0xf]
        %v1133 = vld [vmem:[#allocation4 + $0x10] sm:$0xf]
        %v1134 = vld [vmem:[#allocation4 + $0x14] sm:$0xf]
        %v1135 = vld [vmem:[#allocation4 + $0x18] sm:$0xf]
        %v1136 = vld [vmem:[#allocation4 + $0x1c] sm:$0xf]
        %v1137 = vld [vmem:[#allocation4 + $0x20] sm:$0xf]
        %v1138 = vld [vmem:[#allocation4 + $0x24] sm:$0xf]
        %v1139 = vld [vmem:[#allocation4 + $0x28] sm:$0xf]
        %v1140 = vld [vmem:[#allocation4 + $0x2c] sm:$0xf]
        %v1141 = vld [vmem:[#allocation4 + $0x30] sm:$0xf]
        %v1142 = vld [vmem:[#allocation4 + $0x34] sm:$0xf]
        %v1143 = vld [vmem:[#allocation4 + $0x38] sm:$0xf]
        %v1144 = vld [vmem:[#allocation4 + $0x3c] sm:$0xf]
        %v1145 = vld [vmem:[%s9] sm:$0x1]
        %v1147 = vlaneseq
        %v1148 = vshrl.u32 %v1147, 7
        %v1149 = vsub.s32 0, %v1148
        %v1150 = vrot.slane %v1145, %v1149
        %v1168 = vunpack.c.l.b16 %v1129
        %v1169 = vunpack.c.l.b16 %v1130
        %v1170 = vunpack.c.l.b16 %v1131
        %v1171 = vunpack.c.l.b16 %v1132
        %v1172 = vunpack.c.l.b16 %v1133
        %v1173 = vunpack.c.l.b16 %v1134
        %v1174 = vunpack.c.l.b16 %v1135
        %v1175 = vunpack.c.l.b16 %v1136
        %v1176 = vunpack.c.l.b16 %v1137
        %v1177 = vunpack.c.l.b16 %v1138
        %v1178 = vunpack.c.l.b16 %v1139
        %v1179 = vunpack.c.l.b16 %v1140
        %v1180 = vunpack.c.l.b16 %v1141
        %v1181 = vunpack.c.l.b16 %v1142
        %v1182 = vunpack.c.l.b16 %v1143
        %v1183 = vunpack.c.l.b16 %v1144
        %v1184 = vpack.c.b16 %v1169, %v1168
        %v1185 = vpack.c.b16 %v1171, %v1170
        %v1186 = vpack.c.b16 %v1173, %v1172
        %v1187 = vpack.c.b16 %v1175, %v1174
        %v1188 = vpack.c.b16 %v1177, %v1176
        %v1189 = vpack.c.b16 %v1179, %v1178
        %v1190 = vpack.c.b16 %v1181, %v1180
        %v1191 = vpack.c.b16 %v1183, %v1182
        %1200 = vmatprep.subr.bf16.mxu0 0
        %1201 = vmatpush1.bf16.msra.mxu0 %v1184
        %1202 = vmatprep.subr.bf16.mxu0 0
        %1203 = vmatpush1.bf16.msra.mxu0 %v1185
        %1204 = vmatprep.subr.bf16.mxu0 0
        %1205 = vmatpush1.bf16.msra.mxu0 %v1186
        %1206 = vmatprep.subr.bf16.mxu0 0
        %1207 = vmatpush1.bf16.msra.mxu0 %v1187
        %1208 = vmatprep.subr.bf16.mxu0 0
        %1209 = vmatpush1.bf16.msra.mxu0 %v1188
        %1210 = vmatprep.subr.bf16.mxu0 0
        %1211 = vmatpush1.bf16.msra.mxu0 %v1189
        %1212 = vmatprep.subr.bf16.mxu0 0
        %1213 = vmatpush1.bf16.msra.mxu0 %v1190
        %1214 = vmatprep.subr.bf16.mxu0 0
        %1215 = vmatpush1.bf16.msra.mxu0 %v1191
        %1216 = vmatprep.subr.bf16.mxu0 0
        %1217 = vmatpush1.bf16.msra.mxu0 0
        %1218 = vmatprep.subr.bf16.mxu0 0
        %1219 = vmatpush1.bf16.msra.mxu0 0
        %1220 = vmatprep.subr.bf16.mxu0 0
        %1221 = vmatpush1.bf16.msra.mxu0 0
        %1222 = vmatprep.subr.bf16.mxu0 0
        %1223 = vmatpush1.bf16.msra.mxu0 0
        %1224 = vmatprep.subr.bf16.mxu0 0
        %1225 = vmatpush1.bf16.msra.mxu0 0
        %1226 = vmatprep.subr.bf16.mxu0 0
        %1227 = vmatpush1.bf16.msra.mxu0 0
        %1228 = vmatprep.subr.bf16.mxu0 0
        %1229 = vmatpush1.bf16.msra.mxu0 0
        %1230 = vmatprep.subr.bf16.mxu0 0
        %1231 = vmatpush1.bf16.msra.mxu0 0
        %1232 = vmatprep.mubr.bf16.mxu0 0
        %1233 = vmatmul.mubr.bf16.gmra.mrb[0].mxu0 %v1121
        %v1234 = vpop.f32.mrb[0].mxu0
        %v1235 = vadd.f32 %v1150, %v1234
        %v1236 = vpop.f32.mrb[0].mxu0
        %v1237 = vpop.f32.mrb[0].mxu0
        %v1238 = vadd.f32 %v1150, %v1237
        %v1239 = vpop.f32.mrb[0].mxu0
        %1240 = vmatprep.mubr.bf16.mxu0 0
        %1241 = vmatmul.mubr.bf16.gmra.mrb[0].mxu0 %v1122
        %v1242 = vpop.f32.mrb[0].mxu0
        %v1243 = vadd.f32 %v1150, %v1242
        %v1244 = vpop.f32.mrb[0].mxu0
        %v1245 = vpop.f32.mrb[0].mxu0
        %v1246 = vadd.f32 %v1150, %v1245
        %v1247 = vpop.f32.mrb[0].mxu0
        %1248 = vmatprep.mubr.bf16.mxu0 0
        %1249 = vmatmul.mubr.bf16.gmra.mrb[0].mxu0 %v1123
        %v1250 = vpop.f32.mrb[0].mxu0
        %v1251 = vadd.f32 %v1150, %v1250
        %v1252 = vpop.f32.mrb[0].mxu0
        %v1253 = vpop.f32.mrb[0].mxu0
        %v1254 = vadd.f32 %v1150, %v1253
        %v1255 = vpop.f32.mrb[0].mxu0
        %1256 = vmatprep.mubr.bf16.mxu0 0
        %1257 = vmatmul.mubr.bf16.gmra.mrb[0].mxu0 %v1124
        %v1258 = vpop.f32.mrb[0].mxu0
        %v1259 = vadd.f32 %v1150, %v1258
        %v1260 = vpop.f32.mrb[0].mxu0
        %v1261 = vpop.f32.mrb[0].mxu0
        %v1262 = vadd.f32 %v1150, %v1261
        %v1263 = vpop.f32.mrb[0].mxu0
        %1264 = vmatprep.mubr.bf16.mxu0 0
        %1265 = vmatmul.mubr.bf16.gmra.mrb[0].mxu0 %v1125
        %v1266 = vpop.f32.mrb[0].mxu0
        %v1267 = vadd.f32 %v1150, %v1266
        %v1268 = vpop.f32.mrb[0].mxu0
        %v1269 = vpop.f32.mrb[0].mxu0
        %v1270 = vadd.f32 %v1150, %v1269
        %v1271 = vpop.f32.mrb[0].mxu0
        %1272 = vmatprep.mubr.bf16.mxu0 0
        %1273 = vmatmul.mubr.bf16.gmra.mrb[0].mxu0 %v1126
        %v1274 = vpop.f32.mrb[0].mxu0
        %v1275 = vadd.f32 %v1150, %v1274
        %v1276 = vpop.f32.mrb[0].mxu0
        %v1277 = vpop.f32.mrb[0].mxu0
        %v1278 = vadd.f32 %v1150, %v1277
        %v1279 = vpop.f32.mrb[0].mxu0
        %1280 = vmatprep.mubr.bf16.mxu0 0
        %1281 = vmatmul.mubr.bf16.gmra.mrb[0].mxu0 %v1127
        %v1282 = vpop.f32.mrb[0].mxu0
        %v1283 = vadd.f32 %v1150, %v1282
        %v1284 = vpop.f32.mrb[0].mxu0
        %v1285 = vpop.f32.mrb[0].mxu0
        %v1286 = vadd.f32 %v1150, %v1285
        %v1287 = vpop.f32.mrb[0].mxu0
        %1288 = vmatprep.mubr.bf16.mxu0 0
        %1289 = vmatmul.mubr.bf16.gmra.mrb[0].mxu0 %v1128
        %v1290 = vpop.f32.mrb[0].mxu0
        %v1291 = vadd.f32 %v1150, %v1290
        %v1292 = vpop.f32.mrb[0].mxu0
        %v1293 = vpop.f32.mrb[0].mxu0
        %v1294 = vadd.f32 %v1150, %v1293
        %v1295 = vpop.f32.mrb[0].mxu0
        %1296 = vdwg.mxu0
        %v1297 = vmax.f32 %v1235, 0.0
        %v1298 = vmax.f32 %v1238, 0.0
        %v1299 = vmax.f32 %v1243, 0.0
        %v1300 = vmax.f32 %v1246, 0.0
        %v1301 = vmax.f32 %v1251, 0.0
        %v1302 = vmax.f32 %v1254, 0.0
        %v1303 = vmax.f32 %v1259, 0.0
        %v1304 = vmax.f32 %v1262, 0.0
        %v1305 = vmax.f32 %v1267, 0.0
        %v1306 = vmax.f32 %v1270, 0.0
        %v1307 = vmax.f32 %v1275, 0.0
        %v1308 = vmax.f32 %v1278, 0.0
        %v1309 = vmax.f32 %v1283, 0.0
        %v1310 = vmax.f32 %v1286, 0.0
        %v1311 = vmax.f32 %v1291, 0.0
        %v1312 = vmax.f32 %v1294, 0.0
        %v1313 = vld [vmem:[%s10] sm:$0x3]
        %v1314 = vpack.c.bf16 %v1298, %v1297
        %v1315 = vpack.c.bf16 %v1300, %v1299
        %v1316 = vpack.c.bf16 %v1302, %v1301
        %v1317 = vpack.c.bf16 %v1304, %v1303
        %v1318 = vpack.c.bf16 %v1306, %v1305
        %v1319 = vpack.c.bf16 %v1308, %v1307
        %v1320 = vpack.c.bf16 %v1310, %v1309
        %v1321 = vpack.c.bf16 %v1312, %v1311
        %v1322 = vld [vmem:[%s11] sm:$0x7]
        %1324 = vset.pattern.permute.xlu0 0
        %1325 = vperm.xlu0 %1324, %v1322
        %v1326 = vpop.permute.xlu0 %1325
        %1328 = vmatprep.subr.bf16.mxu0 0
        %1329 = vmatpush1.bf16.xpose.msra.mxu0 %v1314
        %1330 = vmatprep.subr.bf16.mxu0 0
        %1331 = vmatpush1.bf16.xpose.msra.mxu0 %v1315
        %1332 = vmatprep.subr.bf16.mxu0 0
        %1333 = vmatpush1.bf16.xpose.msra.mxu0 %v1316
        %1334 = vmatprep.subr.bf16.mxu0 0
        %1335 = vmatpush1.bf16.xpose.msra.mxu0 %v1317
        %1336 = vmatprep.subr.bf16.mxu0 0
        %1337 = vmatpush1.bf16.xpose.msra.mxu0 %v1318
        %1338 = vmatprep.subr.bf16.mxu0 0
        %1339 = vmatpush1.bf16.xpose.msra.mxu0 %v1319
        %1340 = vmatprep.subr.bf16.mxu0 0
        %1341 = vmatpush1.bf16.xpose.msra.mxu0 %v1320
        %1342 = vmatprep.subr.bf16.mxu0 0
        %1343 = vmatpush1.bf16.xpose.msra.mxu0 %v1321
        %1344 = vmatprep.subr.bf16.mxu0 0
        %1345 = vmatpush1.bf16.xpose.msra.mxu0 0
        %1346 = vmatprep.subr.bf16.mxu0 0
        %1347 = vmatpush1.bf16.xpose.msra.mxu0 0
        %1348 = vmatprep.subr.bf16.mxu0 0
        %1349 = vmatpush1.bf16.xpose.msra.mxu0 0
        %1350 = vmatprep.subr.bf16.mxu0 0
        %1351 = vmatpush1.bf16.xpose.msra.mxu0 0
        %1352 = vmatprep.subr.bf16.mxu0 0
        %1353 = vmatpush1.bf16.xpose.msra.mxu0 0
        %1354 = vmatprep.subr.bf16.mxu0 0
        %1355 = vmatpush1.bf16.xpose.msra.mxu0 0
        %1356 = vmatprep.subr.bf16.mxu0 0
        %1357 = vmatpush1.bf16.xpose.msra.mxu0 0
        %1358 = vmatprep.subr.bf16.mxu0 0
        %1359 = vmatpush1.bf16.xpose.msra.mxu0 0
        %1360 = vmatprep.mubr.bf16.mxu0 0
        %1361 = vmatmul.mubr.bf16.gmra.mrb[0].mxu0 %v1313
        %v1362 = vpop.f32.mrb[0].mxu0
        %v1363 = vadd.f32 %v1326, %v1362
        %v1364 = vpop.f32.mrb[0].mxu0
        %v1365 = vpop.f32.mrb[0].mxu0
        %v1366 = vpop.f32.mrb[0].mxu0
        %1367 = vdwg.mxu0
        %1368 = vst [vmem:[%s491] sm:$0x7] %v1363
        %p1369 = scmp.lt.s32.totalorder %s30, 1
        %s1370 = scalar_select %p1369, %s30, 1
        %p1371 = scmp.lt.s32.totalorder %s29, 0
        %s1372 = scalar_select %p1371, %s29, 0
        %s1373 = sadd.s32 %s1372, %s1370
        %s1374 = smul.addr %s1373, 4
        %s1375 = scalar_lea.vmem %s12, %s1374
        // Predicated region
        $region77: #{tpu_custom_call.1} parent=67 // pred_check
          %p1376 = pneg %p324
        $region78: #{tpu_custom_call.1} parent=67 // pred_check_branch
          %1378 = sbr.rel (%p1376) target = $region80
        $region79: #{tpu_custom_call.1} parent=67 // pred_region
          _
        $region80: #{tpu_custom_call.1} parent=67 // pred_fallthru
          _
      $region68: #{tpu_custom_call.1} parent=5 // pred_fallthru
        _
      %p1379 = scmp.le.s32.totalorder 2, %s20
      // Predicated region
      $region81: #{tpu_custom_call.1} parent=5 // pred_check
        %p1380 = pneg %p1379
      $region82: #{tpu_custom_call.1} parent=5 // pred_check_branch
        %1382 = sbr.rel (%p1380) target = $region84
      $region83: #{tpu_custom_call.1} parent=5 // pred_region
        %s1383 = ssub.s32 %s20, 2
        // Predicated region
        $region85: #{tpu_custom_call.1} parent=83 // pred_check
          %p1384 = pneg %p330
        $region86: #{tpu_custom_call.1} parent=83 // pred_check_branch
          %1386 = sbr.rel (%p1384) target = $region88
        $region87: #{tpu_custom_call.1} parent=83 // pred_region
          %p1387 = scmp.lt.s32.totalorder %s32, 1
          %s1388 = scalar_select %p1387, %s32, 1
          %p1389 = scmp.lt.s32.totalorder %s31, 0
          %s1390 = scalar_select %p1389, %s31, 0
          %s1391 = sadd.s32 %s1390, %s1388
          %s1392 = smul.addr %s1391, 4
          %s1393 = scalar_lea.vmem %s12, %s1392
        $region88: #{tpu_custom_call.1} parent=83 // pred_fallthru
          _
      $region84: #{tpu_custom_call.1} parent=5 // pred_fallthru
        _
    $region6: #{tpu_custom_call.1} parent=1 // loop_footer
      %s24 = sadd.s32 1, %s20
    $region7: #{tpu_custom_call.1} parent=1 // loop_footer_branch
      %19 = sbr.rel target = $region3
    $region8: #{tpu_custom_call.1} parent=1 // loop_exit
      _
    %1394 = vsyncpa [#allocation3], 1
    %s1395 = scalar_lea.sflag [#allocation3], 1
    %1396 = vsyncpa %s1395, 1
    %1397 = vsyncpa [#allocation5], 1

</llo_original>
